<compile_context>
chip_gen: v5e
topology: v5e:2x2
jax: 0.10.0
libtpu: 0.0.40
codegen_flags: <defaults>
</compile_context>

<pallas_src>
import functools

import jax
import jax.numpy as jnp
from jax.experimental import pallas as pl
from jax.experimental.pallas import tpu as pltpu


EMB_DIM = 64          # networks.get_network(..., n_classes=64) -> 64-ch embedding
TM_TARGET = 1024      # packed-row tile; multiple of 8, keeps tiles ~< 2 MiB
_COMPILER_PARAMS = pltpu.CompilerParams(
    dimension_semantics=("parallel",),        # shard row-grid across v7x's 2 TCs
    vmem_limit_bytes=32 * 1024 * 1024,        # explicit, safe on v7x (64 MiB VMEM)
)


def _round_up(x, m):
    return ((x + m - 1) // m) * m


def _pick_npack(n_pixels, cf):
    """Pixels packed per row: aim for K ~= 128 / lane-dense Cout; must divide P."""
    target = max(2, 128 // cf)
    npack = 1
    while npack * 2 <= target and n_pixels % (npack * 2) == 0:
        npack *= 2
    return npack


# ----------------------------- Pallas kernels ------------------------------

def _backbone_feat(x_ref, wf_ref, bf_ref, *, k_in):
    # Tiny-K (3 channels per pixel) 1x1 conv as VPU broadcast-FMAs; avoids
    # paying MXU push/pop latency at ~2% utilization and keeps the MXU free
    # for the following score matmul.
    x = x_ref[...].astype(jnp.float32)        # [TM, k_in]
    wf = wf_ref[...]                          # [k_in, Kf] (block-diag packed)
    acc = bf_ref[...]                         # [1, Kf]; broadcasts on first add
    for c in range(k_in):
        acc = acc + x[:, c:c + 1] * wf[c:c + 1, :]
    return jnp.maximum(acc, 0.0)              # ReLU'd features [TM, Kf]


def _fused_scale_kernel(x_ref, wf_ref, bf_ref, ws_ref, bs_ref, o_ref, *, k_in):
    feat = _backbone_feat(x_ref, wf_ref, bf_ref, k_in=k_in)
    acc = jnp.dot(feat, ws_ref[...], preferred_element_type=jnp.float32)
    o_ref[...] = (acc + bs_ref[...]).astype(o_ref.dtype)


def _fused_scale_skip_kernel(x_ref, wf_ref, bf_ref, ws_ref, bs_ref, s_ref,
                             o_ref, *, k_in):
    feat = _backbone_feat(x_ref, wf_ref, bf_ref, k_in=k_in)
    acc = jnp.dot(feat, ws_ref[...], preferred_element_type=jnp.float32)
    acc = acc + bs_ref[...] + s_ref[...].astype(jnp.float32)
    o_ref[...] = acc.astype(o_ref.dtype)


# ------------------------------ Pallas wrapper ------------------------------

def fused_scale(x2d, wf, bf, ws, bs, skip2d=None, out_dtype=jnp.float32):
    """Fused (1x1 conv + ReLU) -> (1x1 conv + bias [+ skip]) over pixels.

    x2d:    [P, cin]        pooled pixels (channels-last, flattened)
    wf/bf:  backbone 1x1    (cin -> cf)
    ws/bs:  score 1x1       (cf  -> EMB_DIM)
    skip2d: optional [P, EMB_DIM] upsampled coarser score (added pre-store)
    returns [P, EMB_DIM] in out_dtype
    """
    P, cin = x2d.shape
    cf = wf.shape[1]
    cs = ws.shape[1]

    npack = _pick_npack(P, cf)
    Pp = P // npack
    k_in, k_f, c_out = npack * cin, npack * cf, npack * cs

    # Pixel packing (row-major reshapes -> free views at the wrapper):
    #   output last dim becomes npack*64 (lane-dense, unmasked stores),
    #   score matmul K becomes npack*cf (fills the MXU depth).
    xp = x2d.reshape(Pp, k_in).astype(jnp.float32)

    # Block-diagonal packed weights / tiled biases.
    wf_p = jnp.zeros((k_in, k_f), jnp.float32)
    ws_p = jnp.zeros((k_f, c_out), jnp.float32)
    for p in range(npack):
        wf_p = wf_p.at[p * cin:(p + 1) * cin, p * cf:(p + 1) * cf].set(wf)
        ws_p = ws_p.at[p * cf:(p + 1) * cf, p * cs:(p + 1) * cs].set(ws)
    bf_p = jnp.tile(bf.astype(jnp.float32), npack).reshape(1, k_f)
    bs_p = jnp.tile(bs.astype(jnp.float32), npack).reshape(1, c_out)

    sp = None
    if skip2d is not None:
        # bf16 halves the largest HBM input stream; widened to f32 in-kernel.
        sp = skip2d.reshape(Pp, c_out).astype(jnp.bfloat16)

    # Row tiling with remainder handled by padding (last rows sliced off).
    TM = min(TM_TARGET, _round_up(Pp, 8))
    Pp_pad = _round_up(Pp, TM)
    if Pp_pad != Pp:
        xp = jnp.pad(xp, ((0, Pp_pad - Pp), (0, 0)))
        if sp is not None:
            sp = jnp.pad(sp, ((0, Pp_pad - Pp), (0, 0)))
    grid = (pl.cdiv(Pp_pad, TM),)

    x_spec = pl.BlockSpec((TM, k_in), lambda i: (i, 0))
    wf_spec = pl.BlockSpec((k_in, k_f), lambda i: (0, 0))       # resident
    bf_spec = pl.BlockSpec((1, k_f), lambda i: (0, 0))          # resident
    ws_spec = pl.BlockSpec((k_f, c_out), lambda i: (0, 0))      # resident
    bs_spec = pl.BlockSpec((1, c_out), lambda i: (0, 0))        # resident
    o_spec = pl.BlockSpec((TM, c_out), lambda i: (i, 0))

    if sp is None:
        kern = functools.partial(_fused_scale_kernel, k_in=k_in)
        in_specs = [x_spec, wf_spec, bf_spec, ws_spec, bs_spec]
        args = (xp, wf_p, bf_p, ws_p, bs_p)
    else:
        kern = functools.partial(_fused_scale_skip_kernel, k_in=k_in)
        s_spec = pl.BlockSpec((TM, c_out), lambda i: (i, 0))
        in_specs = [x_spec, wf_spec, bf_spec, ws_spec, bs_spec, s_spec]
        args = (xp, wf_p, bf_p, ws_p, bs_p, sp)

    out = pl.pallas_call(
        kern,
        out_shape=jax.ShapeDtypeStruct((Pp_pad, c_out), out_dtype),
        grid=grid,
        in_specs=in_specs,
        out_specs=o_spec,
        compiler_params=_COMPILER_PARAMS,
    )(*args)

    return out[:Pp].reshape(P, cs)


# ------------------------------- glue (JAX) --------------------------------

def avg_pool_nhwc(x, f):
    n, h, w, c = x.shape
    return x.reshape(n, h // f, f, w // f, f, c).mean(axis=(2, 4))


def upsample_bilinear_nhwc(x, H, W):
    # TODO(synk): jax.image.resize(bilinear) ~ F.interpolate(align_corners=False)
    # but not bit-identical at image boundaries.
    n, _, _, c = x.shape
    return jax.image.resize(x, (n, H, W, c), method="bilinear")


# ------------------------------ model params -------------------------------

def init_params(key):
    def dense(k, cin, cout):
        k1, k2 = jax.random.split(k)
        w = jax.random.normal(k1, (cin, cout), jnp.float32) / jnp.sqrt(jnp.float32(cin))
        b = 0.01 * jax.random.normal(k2, (cout,), jnp.float32)
        return w, b

    keys = jax.random.split(key, 6)
    return {
        "feat8":   dense(keys[0], 3, 16),        # backbone /8 features
        "feat16":  dense(keys[1], 3, 32),        # backbone /16 features
        "feat32":  dense(keys[2], 3, 64),        # backbone /32 features
        "score8":  dense(keys[3], 16, EMB_DIM),  # embedding head 1x1 convs
        "score16": dense(keys[4], 32, EMB_DIM),
        "score32": dense(keys[5], 64, EMB_DIM),
    }


# ------------------------------ forward pass -------------------------------

def two_heads_miou_forward(params, x_nchw):
    x = jnp.transpose(x_nchw, (0, 2, 3, 1)).astype(jnp.float32)  # NCHW -> NHWC
    n, H, W, _ = x.shape

    # ---- feature_extracter.extract_features + embedding_head.upsample ----
    # TODO(synk): the real e_net backbone (networks.get_network) is not in the
    # provided source; a pooled 1x1-conv + ReLU stage per stride stands in for
    # it.  Each stride's (feat conv + ReLU) and (score conv + bias + skip add)
    # run as a single fused Pallas kernel (FCN8-style coarse->fine fusion).
    def scale(f, feat_name, score_name, skip_nhwc=None, out_dtype=jnp.bfloat16):
        xp = avg_pool_nhwc(x, f)
        nn_, hh, ww, cc = xp.shape
        wf, bf = params[feat_name]
        ws, bs = params[score_name]
        s2d = None if skip_nhwc is None else skip_nhwc.reshape(-1, EMB_DIM)
        y = fused_scale(xp.reshape(-1, cc), wf, bf, ws, bs, skip2d=s2d,
                        out_dtype=out_dtype)
        return y.reshape(nn_, hh, ww, EMB_DIM)

    s32 = scale(32, "feat32", "score32")                                  # /32
    s16 = scale(16, "feat16", "score16",
                upsample_bilinear_nhwc(s32, H // 16, W // 16))            # /16
    s8 = scale(8, "feat8", "score8",
               upsample_bilinear_nhwc(s16, H // 8, W // 8),
               out_dtype=jnp.float32)                                     # /8
    emb = upsample_bilinear_nhwc(s8, H, W)                        # [N, H, W, 64]

    embedding_mask = jnp.transpose(emb, (0, 3, 1, 2)).astype(jnp.float32)
    return {"embedding_mask": embedding_mask}


# ---------------------------------- main ------------------------------------

if __name__ == "__main__":
    key = jax.random.PRNGKey(0)
    kx, kp = jax.random.split(key)

    # PyTorch-style NCHW RGB images, small spatial size divisible by 32.
    x = jax.random.normal(kx, (2, 3, 32, 32), jnp.float32)
    params = init_params(kp)

    fwd = jax.jit(two_heads_miou_forward)
    out = fwd(params, x)
    emb = jax.block_until_ready(out["embedding_mask"])

    assert emb.shape == (2, EMB_DIM, 32, 32), emb.shape
    assert emb.dtype == jnp.float32
    assert bool(jnp.all(jnp.isfinite(emb)))
    print("KERNEL_OK")
</pallas_src>

<mosaic_0001>
module attributes {stable_mosaic.version = 11 : i64} {
  func.func @_fused_scale_kernel(%arg0: i32, %arg1: memref<8x6xf32, #tpu.memory_space<vmem>>, %arg2: memref<6x128xf32, #tpu.memory_space<vmem>>, %arg3: memref<1x128xf32, #tpu.memory_space<vmem>>, %arg4: memref<128x128xf32, #tpu.memory_space<vmem>>, %arg5: memref<1x128xf32, #tpu.memory_space<vmem>>, %arg6: memref<8x128xbf16, #tpu.memory_space<vmem>>) attributes {dimension_semantics = [#tpu.dimension_semantics<parallel>], iteration_bounds = array<i64: 1>, scalar_prefetch = 0 : i64, scratch_operands = 0 : i64, tpu.core_type = #tpu.core_type<tc>, window_params = [{transform_indices = @transform_0, window_bounds = array<i64: 8, 6>}, {pipeline_mode = #tpu.pipeline_mode<synchronous>, transform_indices = @transform_1, window_bounds = array<i64: 6, 128>}, {pipeline_mode = #tpu.pipeline_mode<synchronous>, transform_indices = @transform_2, window_bounds = array<i64: 1, 128>}, {pipeline_mode = #tpu.pipeline_mode<synchronous>, transform_indices = @transform_3, window_bounds = array<i64: 128, 128>}, {pipeline_mode = #tpu.pipeline_mode<synchronous>, transform_indices = @transform_4, window_bounds = array<i64: 1, 128>}, {transform_indices = @transform_5, window_bounds = array<i64: 8, 128>}]} {
    %c0 = arith.constant 0 : index
    %c0_0 = arith.constant 0 : index
    %0 = vector.load %arg1[%c0, %c0_0] : memref<8x6xf32, #tpu.memory_space<vmem>>, vector<8x6xf32>
    %c0_1 = arith.constant 0 : index
    %c0_2 = arith.constant 0 : index
    %1 = vector.load %arg2[%c0_1, %c0_2] : memref<6x128xf32, #tpu.memory_space<vmem>>, vector<6x128xf32>
    %c0_3 = arith.constant 0 : index
    %c0_4 = arith.constant 0 : index
    %2 = vector.load %arg3[%c0_3, %c0_4] : memref<1x128xf32, #tpu.memory_space<vmem>>, vector<1x128xf32>
    %3 = vector.extract_strided_slice %0 {offsets = [0, 0], sizes = [8, 1], strides = [1, 1]} : vector<8x6xf32> to vector<8x1xf32>
    %4 = vector.extract_strided_slice %1 {offsets = [0, 0], sizes = [1, 128], strides = [1, 1]} : vector<6x128xf32> to vector<1x128xf32>
    %5 = vector.broadcast %3 : vector<8x1xf32> to vector<8x128xf32>
    %6 = vector.broadcast %4 : vector<1x128xf32> to vector<8x128xf32>
    %7 = arith.mulf %5, %6 : vector<8x128xf32>
    %8 = vector.broadcast %2 : vector<1x128xf32> to vector<8x128xf32>
    %9 = arith.addf %8, %7 : vector<8x128xf32>
    %10 = vector.extract_strided_slice %0 {offsets = [0, 1], sizes = [8, 1], strides = [1, 1]} : vector<8x6xf32> to vector<8x1xf32>
    %11 = vector.extract_strided_slice %1 {offsets = [1, 0], sizes = [1, 128], strides = [1, 1]} : vector<6x128xf32> to vector<1x128xf32>
    %12 = vector.broadcast %10 : vector<8x1xf32> to vector<8x128xf32>
    %13 = vector.broadcast %11 : vector<1x128xf32> to vector<8x128xf32>
    %14 = arith.mulf %12, %13 : vector<8x128xf32>
    %15 = arith.addf %9, %14 : vector<8x128xf32>
    %16 = vector.extract_strided_slice %0 {offsets = [0, 2], sizes = [8, 1], strides = [1, 1]} : vector<8x6xf32> to vector<8x1xf32>
    %17 = vector.extract_strided_slice %1 {offsets = [2, 0], sizes = [1, 128], strides = [1, 1]} : vector<6x128xf32> to vector<1x128xf32>
    %18 = vector.broadcast %16 : vector<8x1xf32> to vector<8x128xf32>
    %19 = vector.broadcast %17 : vector<1x128xf32> to vector<8x128xf32>
    %20 = arith.mulf %18, %19 : vector<8x128xf32>
    %21 = arith.addf %15, %20 : vector<8x128xf32>
    %22 = vector.extract_strided_slice %0 {offsets = [0, 3], sizes = [8, 1], strides = [1, 1]} : vector<8x6xf32> to vector<8x1xf32>
    %23 = vector.extract_strided_slice %1 {offsets = [3, 0], sizes = [1, 128], strides = [1, 1]} : vector<6x128xf32> to vector<1x128xf32>
    %24 = vector.broadcast %22 : vector<8x1xf32> to vector<8x128xf32>
    %25 = vector.broadcast %23 : vector<1x128xf32> to vector<8x128xf32>
    %26 = arith.mulf %24, %25 : vector<8x128xf32>
    %27 = arith.addf %21, %26 : vector<8x128xf32>
    %28 = vector.extract_strided_slice %0 {offsets = [0, 4], sizes = [8, 1], strides = [1, 1]} : vector<8x6xf32> to vector<8x1xf32>
    %29 = vector.extract_strided_slice %1 {offsets = [4, 0], sizes = [1, 128], strides = [1, 1]} : vector<6x128xf32> to vector<1x128xf32>
    %30 = vector.broadcast %28 : vector<8x1xf32> to vector<8x128xf32>
    %31 = vector.broadcast %29 : vector<1x128xf32> to vector<8x128xf32>
    %32 = arith.mulf %30, %31 : vector<8x128xf32>
    %33 = arith.addf %27, %32 : vector<8x128xf32>
    %34 = vector.extract_strided_slice %0 {offsets = [0, 5], sizes = [8, 1], strides = [1, 1]} : vector<8x6xf32> to vector<8x1xf32>
    %35 = vector.extract_strided_slice %1 {offsets = [5, 0], sizes = [1, 128], strides = [1, 1]} : vector<6x128xf32> to vector<1x128xf32>
    %36 = vector.broadcast %34 : vector<8x1xf32> to vector<8x128xf32>
    %37 = vector.broadcast %35 : vector<1x128xf32> to vector<8x128xf32>
    %38 = arith.mulf %36, %37 : vector<8x128xf32>
    %39 = arith.addf %33, %38 : vector<8x128xf32>
    %cst = arith.constant 0.000000e+00 : f32
    %40 = vector.broadcast %cst : f32 to vector<8x128xf32>
    %41 = arith.maximumf %39, %40 : vector<8x128xf32>
    %c0_5 = arith.constant 0 : index
    %c0_6 = arith.constant 0 : index
    %42 = vector.load %arg4[%c0_5, %c0_6] : memref<128x128xf32, #tpu.memory_space<vmem>>, vector<128x128xf32>
    %cst_7 = arith.constant dense<0.000000e+00> : vector<8x128xf32>
    %43 = tpu.matmul %41, %42, %cst_7 {dimension_numbers = #tpu.dot_dimension_numbers<[1], [0], [0], [1], [0, 0, 1, 1], [], []>} : vector<8x128xf32>, vector<128x128xf32>, vector<8x128xf32> -> vector<8x128xf32>
    %c0_8 = arith.constant 0 : index
    %c0_9 = arith.constant 0 : index
    %44 = vector.load %arg5[%c0_8, %c0_9] : memref<1x128xf32, #tpu.memory_space<vmem>>, vector<1x128xf32>
    %45 = vector.broadcast %44 : vector<1x128xf32> to vector<8x128xf32>
    %46 = arith.addf %43, %45 : vector<8x128xf32>
    %47 = arith.truncf %46 : vector<8x128xf32> to vector<8x128xbf16>
    %c0_10 = arith.constant 0 : index
    %c0_11 = arith.constant 0 : index
    %48 = vector.load %arg6[%c0_10, %c0_11] : memref<8x128xbf16, #tpu.memory_space<vmem>>, vector<8x128xbf16>
    tpu.vector_store %arg6[%c0_10, %c0_11], %47 {strides = array<i32>} : memref<8x128xbf16, #tpu.memory_space<vmem>>, vector<8x128xbf16>,
    return
  }
  func.func @transform_0(%arg0: i32) -> (i32, i32) {
    %c0_i32 = arith.constant 0 : i32
    %c0_i32_0 = arith.constant 0 : i32
    return %arg0, %c0_i32 : i32, i32
  }
  func.func @transform_1(%arg0: i32) -> (i32, i32) {
    %c0_i32 = arith.constant 0 : i32
    %c0_i32_0 = arith.constant 0 : i32
    %c0_i32_1 = arith.constant 0 : i32
    return %c0_i32, %c0_i32_0 : i32, i32
  }
  func.func @transform_2(%arg0: i32) -> (i32, i32) {
    %c0_i32 = arith.constant 0 : i32
    %c0_i32_0 = arith.constant 0 : i32
    %c0_i32_1 = arith.constant 0 : i32
    return %c0_i32, %c0_i32_0 : i32, i32
  }
  func.func @transform_3(%arg0: i32) -> (i32, i32) {
    %c0_i32 = arith.constant 0 : i32
    %c0_i32_0 = arith.constant 0 : i32
    %c0_i32_1 = arith.constant 0 : i32
    return %c0_i32, %c0_i32_0 : i32, i32
  }
  func.func @transform_4(%arg0: i32) -> (i32, i32) {
    %c0_i32 = arith.constant 0 : i32
    %c0_i32_0 = arith.constant 0 : i32
    %c0_i32_1 = arith.constant 0 : i32
    return %c0_i32, %c0_i32_0 : i32, i32
  }
  func.func @transform_5(%arg0: i32) -> (i32, i32) {
    %c0_i32 = arith.constant 0 : i32
    %c0_i32_0 = arith.constant 0 : i32
    return %arg0, %c0_i32 : i32, i32
  }
}

module attributes {stable_mosaic.version = 11 : i64} {
  func.func @_fused_scale_skip_kernel(%arg0: i32, %arg1: memref<8x12xf32, #tpu.memory_space<vmem>>, %arg2: memref<12x128xf32, #tpu.memory_space<vmem>>, %arg3: memref<1x128xf32, #tpu.memory_space<vmem>>, %arg4: memref<128x256xf32, #tpu.memory_space<vmem>>, %arg5: memref<1x256xf32, #tpu.memory_space<vmem>>, %arg6: memref<8x256xbf16, #tpu.memory_space<vmem>>, %arg7: memref<8x256xbf16, #tpu.memory_space<vmem>>) attributes {dimension_semantics = [#tpu.dimension_semantics<parallel>], iteration_bounds = array<i64: 1>, scalar_prefetch = 0 : i64, scratch_operands = 0 : i64, tpu.core_type = #tpu.core_type<tc>, window_params = [{transform_indices = @transform_0, window_bounds = array<i64: 8, 12>}, {pipeline_mode = #tpu.pipeline_mode<synchronous>, transform_indices = @transform_1, window_bounds = array<i64: 12, 128>}, {pipeline_mode = #tpu.pipeline_mode<synchronous>, transform_indices = @transform_2, window_bounds = array<i64: 1, 128>}, {pipeline_mode = #tpu.pipeline_mode<synchronous>, transform_indices = @transform_3, window_bounds = array<i64: 128, 256>}, {pipeline_mode = #tpu.pipeline_mode<synchronous>, transform_indices = @transform_4, window_bounds = array<i64: 1, 256>}, {transform_indices = @transform_5, window_bounds = array<i64: 8, 256>}, {transform_indices = @transform_6, window_bounds = array<i64: 8, 256>}]} {
    %c0 = arith.constant 0 : index
    %c0_0 = arith.constant 0 : index
    %0 = vector.load %arg1[%c0, %c0_0] : memref<8x12xf32, #tpu.memory_space<vmem>>, vector<8x12xf32>
    %c0_1 = arith.constant 0 : index
    %c0_2 = arith.constant 0 : index
    %1 = vector.load %arg2[%c0_1, %c0_2] : memref<12x128xf32, #tpu.memory_space<vmem>>, vector<12x128xf32>
    %c0_3 = arith.constant 0 : index
    %c0_4 = arith.constant 0 : index
    %2 = vector.load %arg3[%c0_3, %c0_4] : memref<1x128xf32, #tpu.memory_space<vmem>>, vector<1x128xf32>
    %3 = vector.extract_strided_slice %0 {offsets = [0, 0], sizes = [8, 1], strides = [1, 1]} : vector<8x12xf32> to vector<8x1xf32>
    %4 = vector.extract_strided_slice %1 {offsets = [0, 0], sizes = [1, 128], strides = [1, 1]} : vector<12x128xf32> to vector<1x128xf32>
    %5 = vector.broadcast %3 : vector<8x1xf32> to vector<8x128xf32>
    %6 = vector.broadcast %4 : vector<1x128xf32> to vector<8x128xf32>
    %7 = arith.mulf %5, %6 : vector<8x128xf32>
    %8 = vector.broadcast %2 : vector<1x128xf32> to vector<8x128xf32>
    %9 = arith.addf %8, %7 : vector<8x128xf32>
    %10 = vector.extract_strided_slice %0 {offsets = [0, 1], sizes = [8, 1], strides = [1, 1]} : vector<8x12xf32> to vector<8x1xf32>
    %11 = vector.extract_strided_slice %1 {offsets = [1, 0], sizes = [1, 128], strides = [1, 1]} : vector<12x128xf32> to vector<1x128xf32>
    %12 = vector.broadcast %10 : vector<8x1xf32> to vector<8x128xf32>
    %13 = vector.broadcast %11 : vector<1x128xf32> to vector<8x128xf32>
    %14 = arith.mulf %12, %13 : vector<8x128xf32>
    %15 = arith.addf %9, %14 : vector<8x128xf32>
    %16 = vector.extract_strided_slice %0 {offsets = [0, 2], sizes = [8, 1], strides = [1, 1]} : vector<8x12xf32> to vector<8x1xf32>
    %17 = vector.extract_strided_slice %1 {offsets = [2, 0], sizes = [1, 128], strides = [1, 1]} : vector<12x128xf32> to vector<1x128xf32>
    %18 = vector.broadcast %16 : vector<8x1xf32> to vector<8x128xf32>
    %19 = vector.broadcast %17 : vector<1x128xf32> to vector<8x128xf32>
    %20 = arith.mulf %18, %19 : vector<8x128xf32>
    %21 = arith.addf %15, %20 : vector<8x128xf32>
    %22 = vector.extract_strided_slice %0 {offsets = [0, 3], sizes = [8, 1], strides = [1, 1]} : vector<8x12xf32> to vector<8x1xf32>
    %23 = vector.extract_strided_slice %1 {offsets = [3, 0], sizes = [1, 128], strides = [1, 1]} : vector<12x128xf32> to vector<1x128xf32>
    %24 = vector.broadcast %22 : vector<8x1xf32> to vector<8x128xf32>
    %25 = vector.broadcast %23 : vector<1x128xf32> to vector<8x128xf32>
    %26 = arith.mulf %24, %25 : vector<8x128xf32>
    %27 = arith.addf %21, %26 : vector<8x128xf32>
    %28 = vector.extract_strided_slice %0 {offsets = [0, 4], sizes = [8, 1], strides = [1, 1]} : vector<8x12xf32> to vector<8x1xf32>
    %29 = vector.extract_strided_slice %1 {offsets = [4, 0], sizes = [1, 128], strides = [1, 1]} : vector<12x128xf32> to vector<1x128xf32>
    %30 = vector.broadcast %28 : vector<8x1xf32> to vector<8x128xf32>
    %31 = vector.broadcast %29 : vector<1x128xf32> to vector<8x128xf32>
    %32 = arith.mulf %30, %31 : vector<8x128xf32>
    %33 = arith.addf %27, %32 : vector<8x128xf32>
    %34 = vector.extract_strided_slice %0 {offsets = [0, 5], sizes = [8, 1], strides = [1, 1]} : vector<8x12xf32> to vector<8x1xf32>
    %35 = vector.extract_strided_slice %1 {offsets = [5, 0], sizes = [1, 128], strides = [1, 1]} : vector<12x128xf32> to vector<1x128xf32>
    %36 = vector.broadcast %34 : vector<8x1xf32> to vector<8x128xf32>
    %37 = vector.broadcast %35 : vector<1x128xf32> to vector<8x128xf32>
    %38 = arith.mulf %36, %37 : vector<8x128xf32>
    %39 = arith.addf %33, %38 : vector<8x128xf32>
    %40 = vector.extract_strided_slice %0 {offsets = [0, 6], sizes = [8, 1], strides = [1, 1]} : vector<8x12xf32> to vector<8x1xf32>
    %41 = vector.extract_strided_slice %1 {offsets = [6, 0], sizes = [1, 128], strides = [1, 1]} : vector<12x128xf32> to vector<1x128xf32>
    %42 = vector.broadcast %40 : vector<8x1xf32> to vector<8x128xf32>
    %43 = vector.broadcast %41 : vector<1x128xf32> to vector<8x128xf32>
    %44 = arith.mulf %42, %43 : vector<8x128xf32>
    %45 = arith.addf %39, %44 : vector<8x128xf32>
    %46 = vector.extract_strided_slice %0 {offsets = [0, 7], sizes = [8, 1], strides = [1, 1]} : vector<8x12xf32> to vector<8x1xf32>
    %47 = vector.extract_strided_slice %1 {offsets = [7, 0], sizes = [1, 128], strides = [1, 1]} : vector<12x128xf32> to vector<1x128xf32>
    %48 = vector.broadcast %46 : vector<8x1xf32> to vector<8x128xf32>
    %49 = vector.broadcast %47 : vector<1x128xf32> to vector<8x128xf32>
    %50 = arith.mulf %48, %49 : vector<8x128xf32>
    %51 = arith.addf %45, %50 : vector<8x128xf32>
    %52 = vector.extract_strided_slice %0 {offsets = [0, 8], sizes = [8, 1], strides = [1, 1]} : vector<8x12xf32> to vector<8x1xf32>
    %53 = vector.extract_strided_slice %1 {offsets = [8, 0], sizes = [1, 128], strides = [1, 1]} : vector<12x128xf32> to vector<1x128xf32>
    %54 = vector.broadcast %52 : vector<8x1xf32> to vector<8x128xf32>
    %55 = vector.broadcast %53 : vector<1x128xf32> to vector<8x128xf32>
    %56 = arith.mulf %54, %55 : vector<8x128xf32>
    %57 = arith.addf %51, %56 : vector<8x128xf32>
    %58 = vector.extract_strided_slice %0 {offsets = [0, 9], sizes = [8, 1], strides = [1, 1]} : vector<8x12xf32> to vector<8x1xf32>
    %59 = vector.extract_strided_slice %1 {offsets = [9, 0], sizes = [1, 128], strides = [1, 1]} : vector<12x128xf32> to vector<1x128xf32>
    %60 = vector.broadcast %58 : vector<8x1xf32> to vector<8x128xf32>
    %61 = vector.broadcast %59 : vector<1x128xf32> to vector<8x128xf32>
    %62 = arith.mulf %60, %61 : vector<8x128xf32>
    %63 = arith.addf %57, %62 : vector<8x128xf32>
    %64 = vector.extract_strided_slice %0 {offsets = [0, 10], sizes = [8, 1], strides = [1, 1]} : vector<8x12xf32> to vector<8x1xf32>
    %65 = vector.extract_strided_slice %1 {offsets = [10, 0], sizes = [1, 128], strides = [1, 1]} : vector<12x128xf32> to vector<1x128xf32>
    %66 = vector.broadcast %64 : vector<8x1xf32> to vector<8x128xf32>
    %67 = vector.broadcast %65 : vector<1x128xf32> to vector<8x128xf32>
    %68 = arith.mulf %66, %67 : vector<8x128xf32>
    %69 = arith.addf %63, %68 : vector<8x128xf32>
    %70 = vector.extract_strided_slice %0 {offsets = [0, 11], sizes = [8, 1], strides = [1, 1]} : vector<8x12xf32> to vector<8x1xf32>
    %71 = vector.extract_strided_slice %1 {offsets = [11, 0], sizes = [1, 128], strides = [1, 1]} : vector<12x128xf32> to vector<1x128xf32>
    %72 = vector.broadcast %70 : vector<8x1xf32> to vector<8x128xf32>
    %73 = vector.broadcast %71 : vector<1x128xf32> to vector<8x128xf32>
    %74 = arith.mulf %72, %73 : vector<8x128xf32>
    %75 = arith.addf %69, %74 : vector<8x128xf32>
    %cst = arith.constant 0.000000e+00 : f32
    %76 = vector.broadcast %cst : f32 to vector<8x128xf32>
    %77 = arith.maximumf %75, %76 : vector<8x128xf32>
    %c0_5 = arith.constant 0 : index
    %c0_6 = arith.constant 0 : index
    %78 = vector.load %arg4[%c0_5, %c0_6] : memref<128x256xf32, #tpu.memory_space<vmem>>, vector<128x256xf32>
    %cst_7 = arith.constant dense<0.000000e+00> : vector<8x256xf32>
    %79 = tpu.matmul %77, %78, %cst_7 {dimension_numbers = #tpu.dot_dimension_numbers<[1], [0], [0], [1], [0, 0, 1, 1], [], []>} : vector<8x128xf32>, vector<128x256xf32>, vector<8x256xf32> -> vector<8x256xf32>
    %c0_8 = arith.constant 0 : index
    %c0_9 = arith.constant 0 : index
    %80 = vector.load %arg5[%c0_8, %c0_9] : memref<1x256xf32, #tpu.memory_space<vmem>>, vector<1x256xf32>
    %81 = vector.broadcast %80 : vector<1x256xf32> to vector<8x256xf32>
    %82 = arith.addf %79, %81 : vector<8x256xf32>
    %c0_10 = arith.constant 0 : index
    %c0_11 = arith.constant 0 : index
    %83 = vector.load %arg6[%c0_10, %c0_11] : memref<8x256xbf16, #tpu.memory_space<vmem>>, vector<8x256xbf16>
    %84 = arith.extf %83 : vector<8x256xbf16> to vector<8x256xf32>
    %85 = arith.addf %82, %84 : vector<8x256xf32>
    %86 = arith.truncf %85 : vector<8x256xf32> to vector<8x256xbf16>
    %c0_12 = arith.constant 0 : index
    %c0_13 = arith.constant 0 : index
    %87 = vector.load %arg7[%c0_12, %c0_13] : memref<8x256xbf16, #tpu.memory_space<vmem>>, vector<8x256xbf16>
    tpu.vector_store %arg7[%c0_12, %c0_13], %86 {strides = array<i32>} : memref<8x256xbf16, #tpu.memory_space<vmem>>, vector<8x256xbf16>,
    return
  }
  func.func @transform_0(%arg0: i32) -> (i32, i32) {
    %c0_i32 = arith.constant 0 : i32
    %c0_i32_0 = arith.constant 0 : i32
    return %arg0, %c0_i32 : i32, i32
  }
  func.func @transform_1(%arg0: i32) -> (i32, i32) {
    %c0_i32 = arith.constant 0 : i32
    %c0_i32_0 = arith.constant 0 : i32
    %c0_i32_1 = arith.constant 0 : i32
    return %c0_i32, %c0_i32_0 : i32, i32
  }
  func.func @transform_2(%arg0: i32) -> (i32, i32) {
    %c0_i32 = arith.constant 0 : i32
    %c0_i32_0 = arith.constant 0 : i32
    %c0_i32_1 = arith.constant 0 : i32
    return %c0_i32, %c0_i32_0 : i32, i32
  }
  func.func @transform_3(%arg0: i32) -> (i32, i32) {
    %c0_i32 = arith.constant 0 : i32
    %c0_i32_0 = arith.constant 0 : i32
    %c0_i32_1 = arith.constant 0 : i32
    return %c0_i32, %c0_i32_0 : i32, i32
  }
  func.func @transform_4(%arg0: i32) -> (i32, i32) {
    %c0_i32 = arith.constant 0 : i32
    %c0_i32_0 = arith.constant 0 : i32
    %c0_i32_1 = arith.constant 0 : i32
    return %c0_i32, %c0_i32_0 : i32, i32
  }
  func.func @transform_5(%arg0: i32) -> (i32, i32) {
    %c0_i32 = arith.constant 0 : i32
    %c0_i32_0 = arith.constant 0 : i32
    return %arg0, %c0_i32 : i32, i32
  }
  func.func @transform_6(%arg0: i32) -> (i32, i32) {
    %c0_i32 = arith.constant 0 : i32
    %c0_i32_0 = arith.constant 0 : i32
    return %arg0, %c0_i32 : i32, i32
  }
}

module attributes {stable_mosaic.version = 11 : i64} {
  func.func @_fused_scale_skip_kernel(%arg0: i32, %arg1: memref<8x24xf32, #tpu.memory_space<vmem>>, %arg2: memref<24x128xf32, #tpu.memory_space<vmem>>, %arg3: memref<1x128xf32, #tpu.memory_space<vmem>>, %arg4: memref<128x512xf32, #tpu.memory_space<vmem>>, %arg5: memref<1x512xf32, #tpu.memory_space<vmem>>, %arg6: memref<8x512xbf16, #tpu.memory_space<vmem>>, %arg7: memref<8x512xf32, #tpu.memory_space<vmem>>) attributes {dimension_semantics = [#tpu.dimension_semantics<parallel>], iteration_bounds = array<i64: 1>, scalar_prefetch = 0 : i64, scratch_operands = 0 : i64, tpu.core_type = #tpu.core_type<tc>, window_params = [{transform_indices = @transform_0, window_bounds = array<i64: 8, 24>}, {pipeline_mode = #tpu.pipeline_mode<synchronous>, transform_indices = @transform_1, window_bounds = array<i64: 24, 128>}, {pipeline_mode = #tpu.pipeline_mode<synchronous>, transform_indices = @transform_2, window_bounds = array<i64: 1, 128>}, {pipeline_mode = #tpu.pipeline_mode<synchronous>, transform_indices = @transform_3, window_bounds = array<i64: 128, 512>}, {pipeline_mode = #tpu.pipeline_mode<synchronous>, transform_indices = @transform_4, window_bounds = array<i64: 1, 512>}, {transform_indices = @transform_5, window_bounds = array<i64: 8, 512>}, {transform_indices = @transform_6, window_bounds = array<i64: 8, 512>}]} {
    %c0 = arith.constant 0 : index
    %c0_0 = arith.constant 0 : index
    %0 = vector.load %arg1[%c0, %c0_0] : memref<8x24xf32, #tpu.memory_space<vmem>>, vector<8x24xf32>
    %c0_1 = arith.constant 0 : index
    %c0_2 = arith.constant 0 : index
    %1 = vector.load %arg2[%c0_1, %c0_2] : memref<24x128xf32, #tpu.memory_space<vmem>>, vector<24x128xf32>
    %c0_3 = arith.constant 0 : index
    %c0_4 = arith.constant 0 : index
    %2 = vector.load %arg3[%c0_3, %c0_4] : memref<1x128xf32, #tpu.memory_space<vmem>>, vector<1x128xf32>
    %3 = vector.extract_strided_slice %0 {offsets = [0, 0], sizes = [8, 1], strides = [1, 1]} : vector<8x24xf32> to vector<8x1xf32>
    %4 = vector.extract_strided_slice %1 {offsets = [0, 0], sizes = [1, 128], strides = [1, 1]} : vector<24x128xf32> to vector<1x128xf32>
    %5 = vector.broadcast %3 : vector<8x1xf32> to vector<8x128xf32>
    %6 = vector.broadcast %4 : vector<1x128xf32> to vector<8x128xf32>
    %7 = arith.mulf %5, %6 : vector<8x128xf32>
    %8 = vector.broadcast %2 : vector<1x128xf32> to vector<8x128xf32>
    %9 = arith.addf %8, %7 : vector<8x128xf32>
    %10 = vector.extract_strided_slice %0 {offsets = [0, 1], sizes = [8, 1], strides = [1, 1]} : vector<8x24xf32> to vector<8x1xf32>
    %11 = vector.extract_strided_slice %1 {offsets = [1, 0], sizes = [1, 128], strides = [1, 1]} : vector<24x128xf32> to vector<1x128xf32>
    %12 = vector.broadcast %10 : vector<8x1xf32> to vector<8x128xf32>
    %13 = vector.broadcast %11 : vector<1x128xf32> to vector<8x128xf32>
    %14 = arith.mulf %12, %13 : vector<8x128xf32>
    %15 = arith.addf %9, %14 : vector<8x128xf32>
    %16 = vector.extract_strided_slice %0 {offsets = [0, 2], sizes = [8, 1], strides = [1, 1]} : vector<8x24xf32> to vector<8x1xf32>
    %17 = vector.extract_strided_slice %1 {offsets = [2, 0], sizes = [1, 128], strides = [1, 1]} : vector<24x128xf32> to vector<1x128xf32>
    %18 = vector.broadcast %16 : vector<8x1xf32> to vector<8x128xf32>
    %19 = vector.broadcast %17 : vector<1x128xf32> to vector<8x128xf32>
    %20 = arith.mulf %18, %19 : vector<8x128xf32>
    %21 = arith.addf %15, %20 : vector<8x128xf32>
    %22 = vector.extract_strided_slice %0 {offsets = [0, 3], sizes = [8, 1], strides = [1, 1]} : vector<8x24xf32> to vector<8x1xf32>
    %23 = vector.extract_strided_slice %1 {offsets = [3, 0], sizes = [1, 128], strides = [1, 1]} : vector<24x128xf32> to vector<1x128xf32>
    %24 = vector.broadcast %22 : vector<8x1xf32> to vector<8x128xf32>
    %25 = vector.broadcast %23 : vector<1x128xf32> to vector<8x128xf32>
    %26 = arith.mulf %24, %25 : vector<8x128xf32>
    %27 = arith.addf %21, %26 : vector<8x128xf32>
    %28 = vector.extract_strided_slice %0 {offsets = [0, 4], sizes = [8, 1], strides = [1, 1]} : vector<8x24xf32> to vector<8x1xf32>
    %29 = vector.extract_strided_slice %1 {offsets = [4, 0], sizes = [1, 128], strides = [1, 1]} : vector<24x128xf32> to vector<1x128xf32>
    %30 = vector.broadcast %28 : vector<8x1xf32> to vector<8x128xf32>
    %31 = vector.broadcast %29 : vector<1x128xf32> to vector<8x128xf32>
    %32 = arith.mulf %30, %31 : vector<8x128xf32>
    %33 = arith.addf %27, %32 : vector<8x128xf32>
    %34 = vector.extract_strided_slice %0 {offsets = [0, 5], sizes = [8, 1], strides = [1, 1]} : vector<8x24xf32> to vector<8x1xf32>
    %35 = vector.extract_strided_slice %1 {offsets = [5, 0], sizes = [1, 128], strides = [1, 1]} : vector<24x128xf32> to vector<1x128xf32>
    %36 = vector.broadcast %34 : vector<8x1xf32> to vector<8x128xf32>
    %37 = vector.broadcast %35 : vector<1x128xf32> to vector<8x128xf32>
    %38 = arith.mulf %36, %37 : vector<8x128xf32>
    %39 = arith.addf %33, %38 : vector<8x128xf32>
    %40 = vector.extract_strided_slice %0 {offsets = [0, 6], sizes = [8, 1], strides = [1, 1]} : vector<8x24xf32> to vector<8x1xf32>
    %41 = vector.extract_strided_slice %1 {offsets = [6, 0], sizes = [1, 128], strides = [1, 1]} : vector<24x128xf32> to vector<1x128xf32>
    %42 = vector.broadcast %40 : vector<8x1xf32> to vector<8x128xf32>
    %43 = vector.broadcast %41 : vector<1x128xf32> to vector<8x128xf32>
    %44 = arith.mulf %42, %43 : vector<8x128xf32>
    %45 = arith.addf %39, %44 : vector<8x128xf32>
    %46 = vector.extract_strided_slice %0 {offsets = [0, 7], sizes = [8, 1], strides = [1, 1]} : vector<8x24xf32> to vector<8x1xf32>
    %47 = vector.extract_strided_slice %1 {offsets = [7, 0], sizes = [1, 128], strides = [1, 1]} : vector<24x128xf32> to vector<1x128xf32>
    %48 = vector.broadcast %46 : vector<8x1xf32> to vector<8x128xf32>
    %49 = vector.broadcast %47 : vector<1x128xf32> to vector<8x128xf32>
    %50 = arith.mulf %48, %49 : vector<8x128xf32>
    %51 = arith.addf %45, %50 : vector<8x128xf32>
    %52 = vector.extract_strided_slice %0 {offsets = [0, 8], sizes = [8, 1], strides = [1, 1]} : vector<8x24xf32> to vector<8x1xf32>
    %53 = vector.extract_strided_slice %1 {offsets = [8, 0], sizes = [1, 128], strides = [1, 1]} : vector<24x128xf32> to vector<1x128xf32>
    %54 = vector.broadcast %52 : vector<8x1xf32> to vector<8x128xf32>
    %55 = vector.broadcast %53 : vector<1x128xf32> to vector<8x128xf32>
    %56 = arith.mulf %54, %55 : vector<8x128xf32>
    %57 = arith.addf %51, %56 : vector<8x128xf32>
    %58 = vector.extract_strided_slice %0 {offsets = [0, 9], sizes = [8, 1], strides = [1, 1]} : vector<8x24xf32> to vector<8x1xf32>
    %59 = vector.extract_strided_slice %1 {offsets = [9, 0], sizes = [1, 128], strides = [1, 1]} : vector<24x128xf32> to vector<1x128xf32>
    %60 = vector.broadcast %58 : vector<8x1xf32> to vector<8x128xf32>
    %61 = vector.broadcast %59 : vector<1x128xf32> to vector<8x128xf32>
    %62 = arith.mulf %60, %61 : vector<8x128xf32>
    %63 = arith.addf %57, %62 : vector<8x128xf32>
    %64 = vector.extract_strided_slice %0 {offsets = [0, 10], sizes = [8, 1], strides = [1, 1]} : vector<8x24xf32> to vector<8x1xf32>
    %65 = vector.extract_strided_slice %1 {offsets = [10, 0], sizes = [1, 128], strides = [1, 1]} : vector<24x128xf32> to vector<1x128xf32>
    %66 = vector.broadcast %64 : vector<8x1xf32> to vector<8x128xf32>
    %67 = vector.broadcast %65 : vector<1x128xf32> to vector<8x128xf32>
    %68 = arith.mulf %66, %67 : vector<8x128xf32>
    %69 = arith.addf %63, %68 : vector<8x128xf32>
    %70 = vector.extract_strided_slice %0 {offsets = [0, 11], sizes = [8, 1], strides = [1, 1]} : vector<8x24xf32> to vector<8x1xf32>
    %71 = vector.extract_strided_slice %1 {offsets = [11, 0], sizes = [1, 128], strides = [1, 1]} : vector<24x128xf32> to vector<1x128xf32>
    %72 = vector.broadcast %70 : vector<8x1xf32> to vector<8x128xf32>
    %73 = vector.broadcast %71 : vector<1x128xf32> to vector<8x128xf32>
    %74 = arith.mulf %72, %73 : vector<8x128xf32>
    %75 = arith.addf %69, %74 : vector<8x128xf32>
    %76 = vector.extract_strided_slice %0 {offsets = [0, 12], sizes = [8, 1], strides = [1, 1]} : vector<8x24xf32> to vector<8x1xf32>
    %77 = vector.extract_strided_slice %1 {offsets = [12, 0], sizes = [1, 128], strides = [1, 1]} : vector<24x128xf32> to vector<1x128xf32>
    %78 = vector.broadcast %76 : vector<8x1xf32> to vector<8x128xf32>
    %79 = vector.broadcast %77 : vector<1x128xf32> to vector<8x128xf32>
    %80 = arith.mulf %78, %79 : vector<8x128xf32>
    %81 = arith.addf %75, %80 : vector<8x128xf32>
    %82 = vector.extract_strided_slice %0 {offsets = [0, 13], sizes = [8, 1], strides = [1, 1]} : vector<8x24xf32> to vector<8x1xf32>
    %83 = vector.extract_strided_slice %1 {offsets = [13, 0], sizes = [1, 128], strides = [1, 1]} : vector<24x128xf32> to vector<1x128xf32>
    %84 = vector.broadcast %82 : vector<8x1xf32> to vector<8x128xf32>
    %85 = vector.broadcast %83 : vector<1x128xf32> to vector<8x128xf32>
    %86 = arith.mulf %84, %85 : vector<8x128xf32>
    %87 = arith.addf %81, %86 : vector<8x128xf32>
    %88 = vector.extract_strided_slice %0 {offsets = [0, 14], sizes = [8, 1], strides = [1, 1]} : vector<8x24xf32> to vector<8x1xf32>
    %89 = vector.extract_strided_slice %1 {offsets = [14, 0], sizes = [1, 128], strides = [1, 1]} : vector<24x128xf32> to vector<1x128xf32>
    %90 = vector.broadcast %88 : vector<8x1xf32> to vector<8x128xf32>
    %91 = vector.broadcast %89 : vector<1x128xf32> to vector<8x128xf32>
    %92 = arith.mulf %90, %91 : vector<8x128xf32>
    %93 = arith.addf %87, %92 : vector<8x128xf32>
    %94 = vector.extract_strided_slice %0 {offsets = [0, 15], sizes = [8, 1], strides = [1, 1]} : vector<8x24xf32> to vector<8x1xf32>
    %95 = vector.extract_strided_slice %1 {offsets = [15, 0], sizes = [1, 128], strides = [1, 1]} : vector<24x128xf32> to vector<1x128xf32>
    %96 = vector.broadcast %94 : vector<8x1xf32> to vector<8x128xf32>
    %97 = vector.broadcast %95 : vector<1x128xf32> to vector<8x128xf32>
    %98 = arith.mulf %96, %97 : vector<8x128xf32>
    %99 = arith.addf %93, %98 : vector<8x128xf32>
    %100 = vector.extract_strided_slice %0 {offsets = [0, 16], sizes = [8, 1], strides = [1, 1]} : vector<8x24xf32> to vector<8x1xf32>
    %101 = vector.extract_strided_slice %1 {offsets = [16, 0], sizes = [1, 128], strides = [1, 1]} : vector<24x128xf32> to vector<1x128xf32>
    %102 = vector.broadcast %100 : vector<8x1xf32> to vector<8x128xf32>
    %103 = vector.broadcast %101 : vector<1x128xf32> to vector<8x128xf32>
    %104 = arith.mulf %102, %103 : vector<8x128xf32>
    %105 = arith.addf %99, %104 : vector<8x128xf32>
    %106 = vector.extract_strided_slice %0 {offsets = [0, 17], sizes = [8, 1], strides = [1, 1]} : vector<8x24xf32> to vector<8x1xf32>
    %107 = vector.extract_strided_slice %1 {offsets = [17, 0], sizes = [1, 128], strides = [1, 1]} : vector<24x128xf32> to vector<1x128xf32>
    %108 = vector.broadcast %106 : vector<8x1xf32> to vector<8x128xf32>
    %109 = vector.broadcast %107 : vector<1x128xf32> to vector<8x128xf32>
    %110 = arith.mulf %108, %109 : vector<8x128xf32>
    %111 = arith.addf %105, %110 : vector<8x128xf32>
    %112 = vector.extract_strided_slice %0 {offsets = [0, 18], sizes = [8, 1], strides = [1, 1]} : vector<8x24xf32> to vector<8x1xf32>
    %113 = vector.extract_strided_slice %1 {offsets = [18, 0], sizes = [1, 128], strides = [1, 1]} : vector<24x128xf32> to vector<1x128xf32>
    %114 = vector.broadcast %112 : vector<8x1xf32> to vector<8x128xf32>
    %115 = vector.broadcast %113 : vector<1x128xf32> to vector<8x128xf32>
    %116 = arith.mulf %114, %115 : vector<8x128xf32>
    %117 = arith.addf %111, %116 : vector<8x128xf32>
    %118 = vector.extract_strided_slice %0 {offsets = [0, 19], sizes = [8, 1], strides = [1, 1]} : vector<8x24xf32> to vector<8x1xf32>
    %119 = vector.extract_strided_slice %1 {offsets = [19, 0], sizes = [1, 128], strides = [1, 1]} : vector<24x128xf32> to vector<1x128xf32>
    %120 = vector.broadcast %118 : vector<8x1xf32> to vector<8x128xf32>
    %121 = vector.broadcast %119 : vector<1x128xf32> to vector<8x128xf32>
    %122 = arith.mulf %120, %121 : vector<8x128xf32>
    %123 = arith.addf %117, %122 : vector<8x128xf32>
    %124 = vector.extract_strided_slice %0 {offsets = [0, 20], sizes = [8, 1], strides = [1, 1]} : vector<8x24xf32> to vector<8x1xf32>
    %125 = vector.extract_strided_slice %1 {offsets = [20, 0], sizes = [1, 128], strides = [1, 1]} : vector<24x128xf32> to vector<1x128xf32>
    %126 = vector.broadcast %124 : vector<8x1xf32> to vector<8x128xf32>
    %127 = vector.broadcast %125 : vector<1x128xf32> to vector<8x128xf32>
    %128 = arith.mulf %126, %127 : vector<8x128xf32>
    %129 = arith.addf %123, %128 : vector<8x128xf32>
    %130 = vector.extract_strided_slice %0 {offsets = [0, 21], sizes = [8, 1], strides = [1, 1]} : vector<8x24xf32> to vector<8x1xf32>
    %131 = vector.extract_strided_slice %1 {offsets = [21, 0], sizes = [1, 128], strides = [1, 1]} : vector<24x128xf32> to vector<1x128xf32>
    %132 = vector.broadcast %130 : vector<8x1xf32> to vector<8x128xf32>
    %133 = vector.broadcast %131 : vector<1x128xf32> to vector<8x128xf32>
    %134 = arith.mulf %132, %133 : vector<8x128xf32>
    %135 = arith.addf %129, %134 : vector<8x128xf32>
    %136 = vector.extract_strided_slice %0 {offsets = [0, 22], sizes = [8, 1], strides = [1, 1]} : vector<8x24xf32> to vector<8x1xf32>
    %137 = vector.extract_strided_slice %1 {offsets = [22, 0], sizes = [1, 128], strides = [1, 1]} : vector<24x128xf32> to vector<1x128xf32>
    %138 = vector.broadcast %136 : vector<8x1xf32> to vector<8x128xf32>
    %139 = vector.broadcast %137 : vector<1x128xf32> to vector<8x128xf32>
    %140 = arith.mulf %138, %139 : vector<8x128xf32>
    %141 = arith.addf %135, %140 : vector<8x128xf32>
    %142 = vector.extract_strided_slice %0 {offsets = [0, 23], sizes = [8, 1], strides = [1, 1]} : vector<8x24xf32> to vector<8x1xf32>
    %143 = vector.extract_strided_slice %1 {offsets = [23, 0], sizes = [1, 128], strides = [1, 1]} : vector<24x128xf32> to vector<1x128xf32>
    %144 = vector.broadcast %142 : vector<8x1xf32> to vector<8x128xf32>
    %145 = vector.broadcast %143 : vector<1x128xf32> to vector<8x128xf32>
    %146 = arith.mulf %144, %145 : vector<8x128xf32>
    %147 = arith.addf %141, %146 : vector<8x128xf32>
    %cst = arith.constant 0.000000e+00 : f32
    %148 = vector.broadcast %cst : f32 to vector<8x128xf32>
    %149 = arith.maximumf %147, %148 : vector<8x128xf32>
    %c0_5 = arith.constant 0 : index
    %c0_6 = arith.constant 0 : index
    %150 = vector.load %arg4[%c0_5, %c0_6] : memref<128x512xf32, #tpu.memory_space<vmem>>, vector<128x512xf32>
    %cst_7 = arith.constant dense<0.000000e+00> : vector<8x512xf32>
    %151 = tpu.matmul %149, %150, %cst_7 {dimension_numbers = #tpu.dot_dimension_numbers<[1], [0], [0], [1], [0, 0, 1, 1], [], []>} : vector<8x128xf32>, vector<128x512xf32>, vector<8x512xf32> -> vector<8x512xf32>
    %c0_8 = arith.constant 0 : index
    %c0_9 = arith.constant 0 : index
    %152 = vector.load %arg5[%c0_8, %c0_9] : memref<1x512xf32, #tpu.memory_space<vmem>>, vector<1x512xf32>
    %153 = vector.broadcast %152 : vector<1x512xf32> to vector<8x512xf32>
    %154 = arith.addf %151, %153 : vector<8x512xf32>
    %c0_10 = arith.constant 0 : index
    %c0_11 = arith.constant 0 : index
    %155 = vector.load %arg6[%c0_10, %c0_11] : memref<8x512xbf16, #tpu.memory_space<vmem>>, vector<8x512xbf16>
    %156 = arith.extf %155 : vector<8x512xbf16> to vector<8x512xf32>
    %157 = arith.addf %154, %156 : vector<8x512xf32>
    %c0_12 = arith.constant 0 : index
    %c0_13 = arith.constant 0 : index
    %158 = vector.load %arg7[%c0_12, %c0_13] : memref<8x512xf32, #tpu.memory_space<vmem>>, vector<8x512xf32>
    tpu.vector_store %arg7[%c0_12, %c0_13], %157 {strides = array<i32>} : memref<8x512xf32, #tpu.memory_space<vmem>>, vector<8x512xf32>,
    return
  }
  func.func @transform_0(%arg0: i32) -> (i32, i32) {
    %c0_i32 = arith.constant 0 : i32
    %c0_i32_0 = arith.constant 0 : i32
    return %arg0, %c0_i32 : i32, i32
  }
  func.func @transform_1(%arg0: i32) -> (i32, i32) {
    %c0_i32 = arith.constant 0 : i32
    %c0_i32_0 = arith.constant 0 : i32
    %c0_i32_1 = arith.constant 0 : i32
    return %c0_i32, %c0_i32_0 : i32, i32
  }
  func.func @transform_2(%arg0: i32) -> (i32, i32) {
    %c0_i32 = arith.constant 0 : i32
    %c0_i32_0 = arith.constant 0 : i32
    %c0_i32_1 = arith.constant 0 : i32
    return %c0_i32, %c0_i32_0 : i32, i32
  }
  func.func @transform_3(%arg0: i32) -> (i32, i32) {
    %c0_i32 = arith.constant 0 : i32
    %c0_i32_0 = arith.constant 0 : i32
    %c0_i32_1 = arith.constant 0 : i32
    return %c0_i32, %c0_i32_0 : i32, i32
  }
  func.func @transform_4(%arg0: i32) -> (i32, i32) {
    %c0_i32 = arith.constant 0 : i32
    %c0_i32_0 = arith.constant 0 : i32
    %c0_i32_1 = arith.constant 0 : i32
    return %c0_i32, %c0_i32_0 : i32, i32
  }
  func.func @transform_5(%arg0: i32) -> (i32, i32) {
    %c0_i32 = arith.constant 0 : i32
    %c0_i32_0 = arith.constant 0 : i32
    return %arg0, %c0_i32 : i32, i32
  }
  func.func @transform_6(%arg0: i32) -> (i32, i32) {
    %c0_i32 = arith.constant 0 : i32
    %c0_i32_0 = arith.constant 0 : i32
    return %arg0, %c0_i32 : i32, i32
  }
}

</mosaic_0001>

<llo_original>
// kernel: tile.33
$region0: #{tile.33}
  #allocation0 [shape = 's32[1]{0}', space=sflag, size = 0x4, scoped, tag = 'scoped memory for tile.33']
  %s0 = inlined_call_operand.vmem [shape: f32[64], index: 0, kind: input, shape index: {}]
  %s1 = inlined_call_operand.vmem [shape: f32[2,64], index: 1, kind: output, shape index: {}]
  // Predicated region
  $region2: #{tile.33} parent=0 // pred_check
    _
  $region3: #{tile.33} parent=0 // pred_check_branch
    %3 = sbr.rel (0) target = $region5
  $region4: #{tile.33} parent=0 // pred_region
    _
  $region5: #{tile.33} parent=0 // pred_fallthru
    _
  %v4 = vld [vmem:[%s0] ss:$0 sm:$0xff]
  %5 = vst [vmem:[%s1] sm:$0x3] %v4

// kernel: tile.34
$region0: #{tile.34}
  %s0 = inlined_call_operand.vmem [shape: f32[2,64], index: 0, kind: input, shape index: {}]
  %s1 = inlined_call_operand.vmem [shape: f32[1,128], index: 1, kind: output, shape index: {}]
  $region1: #{tile.34} parent=0
    #allocation0 [shape = 'u8[4096]{0}', space=vmem, size = 0x1000, scoped, tag = 'scoped mem for output reshape']
    #allocation1 [shape = 'u8[4096]{0}', space=vmem, size = 0x1000, scoped, tag = 'scoped mem for input reshape']
    %s3 = ssub.s32 4, 1
    %v4 = vld [vmem:[%s0] sm:%s3]
    %5 = vst [vmem:[#allocation1] sm:%s3] %v4
    %v6 = vld [vmem:[#allocation1] sm:$0x1]
    %vm7 = vcmask 523264
    %8 = vst.msk [vmem:[#allocation0] sm:$0x1] %vm7, %v6
    %s9 = scalar_lea.vmem [#allocation1], 1
    %v10 = vld [vmem:[%s9] sm:$0x1]
    %11 = vrot.lane.b32.xlu0 %v10, 64
    %v12 = vpop.permute.xlu0 %11
    %vm13 = vcmask 1048064
    %14 = vst.msk [vmem:[#allocation0] sm:$0x1] %vm13, %v12
    %s16 = ssub.s32 2, 1
    %v17 = vld [vmem:[#allocation0] sm:%s16]
    %s19 = ssub.s32 2, 1
    %20 = vst [vmem:[%s1] sm:%s19] %v17

// kernel: tile.43
$region0: #{tile.43}
  #allocation0 [shape = 's32[1]{0}', space=sflag, size = 0x4, scoped, tag = 'scoped memory for tile.43']
  %s0 = inlined_call_operand.vmem [shape: f32[32], index: 0, kind: input, shape index: {}]
  %s1 = inlined_call_operand.vmem [shape: f32[4,32], index: 1, kind: output, shape index: {}]
  // Predicated region
  $region2: #{tile.43} parent=0 // pred_check
    _
  $region3: #{tile.43} parent=0 // pred_check_branch
    %3 = sbr.rel (0) target = $region5
  $region4: #{tile.43} parent=0 // pred_region
    _
  $region5: #{tile.43} parent=0 // pred_fallthru
    _
  %v4 = vld [vmem:[%s0] ss:$0 sm:$0xff]
  %5 = vst [vmem:[%s1] sm:$0xf] %v4

// kernel: tile.44
$region0: #{tile.44}
  %s0 = inlined_call_operand.vmem [shape: f32[4,32], index: 0, kind: input, shape index: {}]
  %s1 = inlined_call_operand.vmem [shape: f32[1,128], index: 1, kind: output, shape index: {}]
  $region1: #{tile.44} parent=0
    #allocation0 [shape = 'u8[4096]{0}', space=vmem, size = 0x1000, scoped, tag = 'scoped mem for output reshape']
    #allocation1 [shape = 'u8[4096]{0}', space=vmem, size = 0x1000, scoped, tag = 'scoped mem for input reshape']
    %s3 = ssub.s32 16, 1
    %v4 = vld [vmem:[%s0] sm:%s3]
    %5 = vst [vmem:[#allocation1] sm:%s3] %v4
    %v6 = vld [vmem:[#allocation1] sm:$0x1]
    %vm7 = vcmask 261120
    %8 = vst.msk [vmem:[#allocation0] sm:$0x1] %vm7, %v6
    %s9 = scalar_lea.vmem [#allocation1], 3
    %v10 = vld [vmem:[%s9] sm:$0x1]
    %11 = vrot.lane.b32.xlu0 %v10, 96
    %v12 = vpop.permute.xlu0 %11
    %vm13 = vcmask 1048320
    %14 = vst.msk [vmem:[#allocation0] sm:$0x1] %vm13, %v12
    %s15 = scalar_lea.vmem [#allocation1], 2
    %v16 = vld [vmem:[%s15] sm:$0x1]
    %17 = vrot.lane.b32.xlu0 %v16, 64
    %v18 = vpop.permute.xlu0 %17
    %vm19 = vcmask 785920
    %20 = vst.msk [vmem:[#allocation0] sm:$0x1] %vm19, %v18
    %s21 = scalar_lea.vmem [#allocation1], 1
    %v22 = vld [vmem:[%s21] sm:$0x1]
    %23 = vrot.lane.b32.xlu0 %v22, 32
    %v24 = vpop.permute.xlu0 %23
    %vm25 = vcmask 523520
    %26 = vst.msk [vmem:[#allocation0] sm:$0x1] %vm25, %v24
    %s28 = ssub.s32 2, 1
    %v29 = vld [vmem:[#allocation0] sm:%s28]
    %s31 = ssub.s32 2, 1
    %32 = vst [vmem:[%s1] sm:%s31] %v29

// kernel: tile.48
$region0: #{tile.48}
  #allocation0 [shape = 's32[1]{0}', space=sflag, size = 0x4, scoped, tag = 'scoped memory for tile.48']
  %s0 = inlined_call_operand.vmem [shape: f32[64], index: 0, kind: input, shape index: {}]
  %s1 = inlined_call_operand.vmem [shape: f32[4,64], index: 1, kind: output, shape index: {}]
  // Predicated region
  $region2: #{tile.48} parent=0 // pred_check
    _
  $region3: #{tile.48} parent=0 // pred_check_branch
    %3 = sbr.rel (0) target = $region5
  $region4: #{tile.48} parent=0 // pred_region
    _
  $region5: #{tile.48} parent=0 // pred_fallthru
    _
  %v4 = vld [vmem:[%s0] ss:$0 sm:$0xff]
  %5 = vst [vmem:[%s1] sm:$0xf] %v4

// kernel: tile.49
$region0: #{tile.49}
  %s0 = inlined_call_operand.vmem [shape: f32[4,64], index: 0, kind: input, shape index: {}]
  %s1 = inlined_call_operand.vmem [shape: f32[1,256], index: 1, kind: output, shape index: {}]
  $region1: #{tile.49} parent=0
    #allocation0 [shape = 'u8[8192]{0}', space=vmem, size = 0x2000, scoped, tag = 'scoped mem for output reshape']
    #allocation1 [shape = 'u8[4096]{0}', space=vmem, size = 0x1000, scoped, tag = 'scoped mem for input reshape']
    %s3 = ssub.s32 16, 1
    %v4 = vld [vmem:[%s0] sm:%s3]
    %5 = vst [vmem:[#allocation1] sm:%s3] %v4
    %s6 = smov 3
    %v7 = vld [vmem:[#allocation1] ss:$2 sm:%s6]
    %vm8 = vcmask 523264
    %9 = vst.msk [vmem:[#allocation0] ss:$8 sm:$0x3] %vm8, %v7
    %s10 = scalar_lea.vmem [#allocation1], 1
    %s11 = smov 3
    %v12 = vld [vmem:[%s10] ss:$2 sm:%s11]
    %13 = vrot.lane.b32.xlu0 %v12, 64
    %v14 = vpop.permute.xlu0 %13
    %vm15 = vcmask 1048064
    %16 = vst.msk [vmem:[#allocation0] ss:$8 sm:$0x3] %vm15, %v14
    %s18 = ssub.s32 2, 1
    %v19 = vld [vmem:[#allocation0] sm:%s18]
    %s21 = ssub.s32 2, 1
    %22 = vst [vmem:[%s1] sm:%s21] %v19
    %s23 = scalar_lea.vmem [#allocation0], 8
    %v24 = vld [vmem:[%s23] sm:%s18]
    %s26 = ssub.s32 2, 1
    %s27 = scalar_lea.vmem %s1, 1
    %28 = vst [vmem:[%s27] sm:%s26] %v24

// kernel: tile.53
$region0: #{tile.53}
  #allocation0 [shape = 's32[1]{0}', space=sflag, size = 0x4, scoped, tag = 'scoped memory for tile.53']
  %s0 = inlined_call_operand.vmem [shape: f32[16], index: 0, kind: input, shape index: {}]
  %s1 = inlined_call_operand.vmem [shape: f32[8,16], index: 1, kind: output, shape index: {}]
  // Predicated region
  $region2: #{tile.53} parent=0 // pred_check
    _
  $region3: #{tile.53} parent=0 // pred_check_branch
    %3 = sbr.rel (0) target = $region5
  $region4: #{tile.53} parent=0 // pred_region
    _
  $region5: #{tile.53} parent=0 // pred_fallthru
    _
  %v4 = vld [vmem:[%s0] ss:$0 sm:$0xff]
  %5 = vst [vmem:[%s1] sm:$0xff] %v4

// kernel: tile.54
$region0: #{tile.54}
  %s0 = inlined_call_operand.vmem [shape: f32[8,16], index: 0, kind: input, shape index: {}]
  %s1 = inlined_call_operand.vmem [shape: f32[1,128], index: 1, kind: output, shape index: {}]
  $region1: #{tile.54} parent=0
    #allocation0 [shape = 'u8[4096]{0}', space=vmem, size = 0x1000, scoped, tag = 'scoped mem for output reshape']
    %v2 = vld [vmem:[%s0] sm:$0x1]
    %vm3 = vcmask 130048
    %4 = vst.msk [vmem:[#allocation0] sm:$0x1] %vm3, %v2
    %s5 = scalar_lea.vmem %s0, 7
    %v6 = vld [vmem:[%s5] sm:$0x1]
    %7 = vrot.lane.b32.xlu0 %v6, 112
    %v8 = vpop.permute.xlu0 %7
    %vm9 = vcmask 1048448
    %10 = vst.msk [vmem:[#allocation0] sm:$0x1] %vm9, %v8
    %s11 = scalar_lea.vmem %s0, 6
    %v12 = vld [vmem:[%s11] sm:$0x1]
    %13 = vrot.lane.b32.xlu0 %v12, 96
    %v14 = vpop.permute.xlu0 %13
    %vm15 = vcmask 917248
    %16 = vst.msk [vmem:[#allocation0] sm:$0x1] %vm15, %v14
    %s17 = scalar_lea.vmem %s0, 5
    %v18 = vld [vmem:[%s17] sm:$0x1]
    %19 = vrot.lane.b32.xlu0 %v18, 80
    %v20 = vpop.permute.xlu0 %19
    %vm21 = vcmask 786048
    %22 = vst.msk [vmem:[#allocation0] sm:$0x1] %vm21, %v20
    %s23 = scalar_lea.vmem %s0, 4
    %v24 = vld [vmem:[%s23] sm:$0x1]
    %25 = vrot.lane.b32.xlu0 %v24, 64
    %v26 = vpop.permute.xlu0 %25
    %vm27 = vcmask 654848
    %28 = vst.msk [vmem:[#allocation0] sm:$0x1] %vm27, %v26
    %s29 = scalar_lea.vmem %s0, 3
    %v30 = vld [vmem:[%s29] sm:$0x1]
    %31 = vrot.lane.b32.xlu0 %v30, 48
    %v32 = vpop.permute.xlu0 %31
    %vm33 = vcmask 523648
    %34 = vst.msk [vmem:[#allocation0] sm:$0x1] %vm33, %v32
    %s35 = scalar_lea.vmem %s0, 2
    %v36 = vld [vmem:[%s35] sm:$0x1]
    %37 = vrot.lane.b32.xlu0 %v36, 32
    %v38 = vpop.permute.xlu0 %37
    %vm39 = vcmask 392448
    %40 = vst.msk [vmem:[#allocation0] sm:$0x1] %vm39, %v38
    %s41 = scalar_lea.vmem %s0, 1
    %v42 = vld [vmem:[%s41] sm:$0x1]
    %43 = vrot.lane.b32.xlu0 %v42, 16
    %v44 = vpop.permute.xlu0 %43
    %vm45 = vcmask 261248
    %46 = vst.msk [vmem:[#allocation0] sm:$0x1] %vm45, %v44
    %s48 = ssub.s32 2, 1
    %v49 = vld [vmem:[#allocation0] sm:%s48]
    %s51 = ssub.s32 2, 1
    %52 = vst [vmem:[%s1] sm:%s51] %v49

// kernel: tile.58
$region0: #{tile.58}
  #allocation0 [shape = 's32[1]{0}', space=sflag, size = 0x4, scoped, tag = 'scoped memory for tile.58']
  %s0 = inlined_call_operand.vmem [shape: f32[64], index: 0, kind: input, shape index: {}]
  %s1 = inlined_call_operand.vmem [shape: f32[8,64], index: 1, kind: output, shape index: {}]
  // Predicated region
  $region2: #{tile.58} parent=0 // pred_check
    _
  $region3: #{tile.58} parent=0 // pred_check_branch
    %3 = sbr.rel (0) target = $region5
  $region4: #{tile.58} parent=0 // pred_region
    _
  $region5: #{tile.58} parent=0 // pred_fallthru
    _
  %v4 = vld [vmem:[%s0] ss:$0 sm:$0xff]
  %5 = vst [vmem:[%s1] sm:$0xff] %v4

// kernel: tile.59
$region0: #{tile.59}
  %s0 = inlined_call_operand.vmem [shape: f32[8,64], index: 0, kind: input, shape index: {}]
  %s1 = inlined_call_operand.vmem [shape: f32[1,512], index: 1, kind: output, shape index: {}]
  $region1: #{tile.59} parent=0
    #allocation0 [shape = 'u8[16384]{0}', space=vmem, size = 0x4000, scoped, tag = 'scoped mem for output reshape']
    %v2 = vld [vmem:[%s0] ss:$2 sm:$0xf]
    %vm3 = vcmask 523264
    %4 = vst.msk [vmem:[#allocation0] ss:$8 sm:$0xf] %vm3, %v2
    %s5 = scalar_lea.vmem %s0, 1
    %v6 = vld [vmem:[%s5] ss:$2 sm:$0xf]
    %7 = vrot.lane.b32.xlu0 %v6, 64
    %v8 = vpop.permute.xlu0 %7
    %vm9 = vcmask 1048064
    %10 = vst.msk [vmem:[#allocation0] ss:$8 sm:$0xf] %vm9, %v8
    %s12 = ssub.s32 2, 1
    %v13 = vld [vmem:[#allocation0] sm:%s12]
    %s15 = ssub.s32 2, 1
    %16 = vst [vmem:[%s1] sm:%s15] %v13
    %s17 = scalar_lea.vmem [#allocation0], 8
    %v18 = vld [vmem:[%s17] sm:%s12]
    %s20 = ssub.s32 2, 1
    %s21 = scalar_lea.vmem %s1, 1
    %22 = vst [vmem:[%s21] sm:%s20] %v18
    %s23 = scalar_lea.vmem [#allocation0], 16
    %v24 = vld [vmem:[%s23] sm:%s12]
    %s26 = ssub.s32 2, 1
    %s27 = scalar_lea.vmem %s1, 2
    %28 = vst [vmem:[%s27] sm:%s26] %v24
    %s29 = scalar_lea.vmem [#allocation0], 24
    %v30 = vld [vmem:[%s29] sm:%s12]
    %s32 = ssub.s32 2, 1
    %s33 = scalar_lea.vmem %s1, 3
    %34 = vst [vmem:[%s33] sm:%s32] %v30

// kernel: two_heads_miou_forward.3
$region0: #{two_heads_miou_forward.3}
  #allocation0 [shape = 'u32[]', space=smem, size = 0x4, offset = 0x4, fixed_abs, tag = 'smem constant byte address 0x4 - core index']
  #allocation1 [shape = 'u32[72,128]{1,0:T(1,128)}', space=vmem, size = 0x9000, scoped, tag = 'internal scratch']
  %s0 = inlined_call_operand.vmem [shape: f32[8,6], index: 0, kind: input, shape index: {}]
  %s1 = inlined_call_operand.vmem [shape: f32[6,128], index: 1, kind: input, shape index: {}]
  %s2 = inlined_call_operand.vmem [shape: f32[1,128], index: 2, kind: input, shape index: {}]
  %s3 = inlined_call_operand.vmem [shape: f32[128,128], index: 3, kind: input, shape index: {}]
  %s4 = inlined_call_operand.vmem [shape: f32[1,128], index: 4, kind: input, shape index: {}]
  %s5 = inlined_call_operand.vmem [shape: bf16[8,128], index: 5, kind: output, shape index: {}]
  %s6 = sld [smem:[#allocation0]]
  $region30: #{two_heads_miou_forward.3} parent=0
    _
  %s8 = ssub.s32 1, %s6
  %s9 = scalar_select 0, %s8, %s6
  // Predicated region
  $region2: #{two_heads_miou_forward.3} parent=0 // pred_check
    _
  $region3: #{two_heads_miou_forward.3} parent=0 // pred_check_branch
    %11 = sbr.rel (0) target = $region5
  $region4: #{two_heads_miou_forward.3} parent=0 // pred_region
    _
  $region5: #{two_heads_miou_forward.3} parent=0 // pred_fallthru
    _
  // Predicated region
  $region6: #{two_heads_miou_forward.3} parent=0 // pred_check
    _
  $region7: #{two_heads_miou_forward.3} parent=0 // pred_check_branch
    %13 = sbr.rel (0) target = $region9
  $region8: #{two_heads_miou_forward.3} parent=0 // pred_region
    _
  $region9: #{two_heads_miou_forward.3} parent=0 // pred_fallthru
    _
  // Predicated region
  $region10: #{two_heads_miou_forward.3} parent=0 // pred_check
    _
  $region11: #{two_heads_miou_forward.3} parent=0 // pred_check_branch
    %15 = sbr.rel (0) target = $region13
  $region12: #{two_heads_miou_forward.3} parent=0 // pred_region
    _
  $region13: #{two_heads_miou_forward.3} parent=0 // pred_fallthru
    _
  // Predicated region
  $region14: #{two_heads_miou_forward.3} parent=0 // pred_check
    _
  $region15: #{two_heads_miou_forward.3} parent=0 // pred_check_branch
    %17 = sbr.rel (0) target = $region17
  $region16: #{two_heads_miou_forward.3} parent=0 // pred_region
    _
  $region17: #{two_heads_miou_forward.3} parent=0 // pred_fallthru
    _
  // Predicated region
  $region18: #{two_heads_miou_forward.3} parent=0 // pred_check
    _
  $region19: #{two_heads_miou_forward.3} parent=0 // pred_check_branch
    %19 = sbr.rel (0) target = $region21
  $region20: #{two_heads_miou_forward.3} parent=0 // pred_region
    _
  $region21: #{two_heads_miou_forward.3} parent=0 // pred_fallthru
    _
  %v20 = vld [vmem:[%s0] sm:$0xff]
  %v21 = vld [vmem:[%s1] sm:$0x3f]
  %v22 = vld [vmem:[%s2] sm:$0x1]
  %24 = vset.pattern.permute.xlu0 0
  %25 = vperm.xlu0 %24, %v20
  %v26 = vpop.permute.xlu0 %25
  %v28 = vperm.slane %v21, 0
  %v29 = vmul.f32 %v26, %v28
  %v31 = vperm.slane %v22, 0
  %v33 = vadd.f32 %v31, %v29
  %34 = vset.pattern.permute.xlu0 1
  %35 = vperm.xlu0 %34, %v20
  %v36 = vpop.permute.xlu0 %35
  %v38 = vperm.slane %v21, 1
  %v39 = vmul.f32 %v36, %v38
  %v40 = vadd.f32 %v33, %v39
  %41 = vset.pattern.permute.xlu0 2
  %42 = vperm.xlu0 %41, %v20
  %v43 = vpop.permute.xlu0 %42
  %v45 = vperm.slane %v21, 2
  %v46 = vmul.f32 %v43, %v45
  %v47 = vadd.f32 %v40, %v46
  %48 = vset.pattern.permute.xlu0 3
  %49 = vperm.xlu0 %48, %v20
  %v50 = vpop.permute.xlu0 %49
  %v52 = vperm.slane %v21, 3
  %v53 = vmul.f32 %v50, %v52
  %v54 = vadd.f32 %v47, %v53
  %55 = vset.pattern.permute.xlu0 4
  %56 = vperm.xlu0 %55, %v20
  %v57 = vpop.permute.xlu0 %56
  %v59 = vperm.slane %v21, 4
  %v60 = vmul.f32 %v57, %v59
  %v61 = vadd.f32 %v54, %v60
  %62 = vset.pattern.permute.xlu0 5
  %63 = vperm.xlu0 %62, %v20
  %v64 = vpop.permute.xlu0 %63
  %v66 = vperm.slane %v21, 5
  %v67 = vmul.f32 %v64, %v66
  %v68 = vadd.f32 %v61, %v67
  %v69 = vmax.f32 %v68, 0.0
  %v70 = vld [vmem:[%s3] sm:$0xff]
  %v71 = vld [vmem:[%s3 + $0x8] sm:$0xff]
  %v72 = vld [vmem:[%s3 + $0x10] sm:$0xff]
  %v73 = vld [vmem:[%s3 + $0x18] sm:$0xff]
  %v74 = vld [vmem:[%s3 + $0x20] sm:$0xff]
  %v75 = vld [vmem:[%s3 + $0x28] sm:$0xff]
  %v76 = vld [vmem:[%s3 + $0x30] sm:$0xff]
  %v77 = vld [vmem:[%s3 + $0x38] sm:$0xff]
  %v78 = vld [vmem:[%s3 + $0x40] sm:$0xff]
  %v79 = vld [vmem:[%s3 + $0x48] sm:$0xff]
  %v80 = vld [vmem:[%s3 + $0x50] sm:$0xff]
  %v81 = vld [vmem:[%s3 + $0x58] sm:$0xff]
  %v82 = vld [vmem:[%s3 + $0x60] sm:$0xff]
  %v83 = vld [vmem:[%s3 + $0x68] sm:$0xff]
  %v84 = vld [vmem:[%s3 + $0x70] sm:$0xff]
  %v85 = vld [vmem:[%s3 + $0x78] sm:$0xff]
  %v86 = vld [vmem:[%s4] sm:$0x1]
  %v88 = vperm.slane %v86, 0
  %90 = vmatpush.msra.mxu0 %v85
  %91 = vmatpush.msra.mxu0 %v84
  %92 = vmatpush.msra.mxu0 %v83
  %93 = vmatpush.msra.mxu0 %v82
  %94 = vmatpush.msra.mxu0 %v81
  %95 = vmatpush.msra.mxu0 %v80
  %96 = vmatpush.msra.mxu0 %v79
  %97 = vmatpush.msra.mxu0 %v78
  %98 = vmatpush.msra.mxu0 %v77
  %99 = vmatpush.msra.mxu0 %v76
  %100 = vmatpush.msra.mxu0 %v75
  %101 = vmatpush.msra.mxu0 %v74
  %102 = vmatpush.msra.mxu0 %v73
  %103 = vmatpush.msra.mxu0 %v72
  %104 = vmatpush.msra.mxu0 %v71
  %105 = vmatpush.msra.mxu0 %v70
  %106 = vmatmul.f32.gmra.mxu0 %v69
  %v107 = vpop.f32.mrf.mxu0
  %v108 = vadd.f32 %v88, %v107
  %109 = vdwg.mxu0
  %v110 = vpack.c.bf16 %v108, %v108
  %111 = vst [vmem:[%s5] sm:$0xf] %v110
  // Predicated region
  $region22: #{two_heads_miou_forward.3} parent=0 // pred_check
    _
  $region23: #{two_heads_miou_forward.3} parent=0 // pred_check_branch
    %113 = sbr.rel (0) target = $region25
  $region24: #{two_heads_miou_forward.3} parent=0 // pred_region
    _
  $region25: #{two_heads_miou_forward.3} parent=0 // pred_fallthru
    _
  // Predicated region
  $region26: #{two_heads_miou_forward.3} parent=0 // pred_check
    _
  $region27: #{two_heads_miou_forward.3} parent=0 // pred_check_branch
    %115 = sbr.rel (0) target = $region29
  $region28: #{two_heads_miou_forward.3} parent=0 // pred_region
    _
  $region29: #{two_heads_miou_forward.3} parent=0 // pred_fallthru
    _

// kernel: two_heads_miou_forward.4
$region0: #{two_heads_miou_forward.4}
  #allocation0 [shape = 'u32[]', space=smem, size = 0x4, offset = 0x4, fixed_abs, tag = 'smem constant byte address 0x4 - core index']
  #allocation1 [shape = 'u32[72,128]{1,0:T(1,128)}', space=vmem, size = 0x9000, scoped, tag = 'internal scratch']
  %s0 = inlined_call_operand.vmem [shape: f32[8,12], index: 0, kind: input, shape index: {}]
  %s1 = inlined_call_operand.vmem [shape: f32[12,128], index: 1, kind: input, shape index: {}]
  %s2 = inlined_call_operand.vmem [shape: f32[1,128], index: 2, kind: input, shape index: {}]
  %s3 = inlined_call_operand.vmem [shape: f32[128,256], index: 3, kind: input, shape index: {}]
  %s4 = inlined_call_operand.vmem [shape: f32[1,256], index: 4, kind: input, shape index: {}]
  %s5 = inlined_call_operand.vmem [shape: bf16[8,256], index: 5, kind: input, shape index: {}]
  %s6 = inlined_call_operand.vmem [shape: bf16[8,256], index: 6, kind: output, shape index: {}]
  %s7 = sld [smem:[#allocation0]]
  $region34: #{two_heads_miou_forward.4} parent=0
    _
  %s9 = ssub.s32 1, %s7
  %s10 = scalar_select 0, %s9, %s7
  // Predicated region
  $region2: #{two_heads_miou_forward.4} parent=0 // pred_check
    _
  $region3: #{two_heads_miou_forward.4} parent=0 // pred_check_branch
    %12 = sbr.rel (0) target = $region5
  $region4: #{two_heads_miou_forward.4} parent=0 // pred_region
    _
  $region5: #{two_heads_miou_forward.4} parent=0 // pred_fallthru
    _
  // Predicated region
  $region6: #{two_heads_miou_forward.4} parent=0 // pred_check
    _
  $region7: #{two_heads_miou_forward.4} parent=0 // pred_check_branch
    %14 = sbr.rel (0) target = $region9
  $region8: #{two_heads_miou_forward.4} parent=0 // pred_region
    _
  $region9: #{two_heads_miou_forward.4} parent=0 // pred_fallthru
    _
  // Predicated region
  $region10: #{two_heads_miou_forward.4} parent=0 // pred_check
    _
  $region11: #{two_heads_miou_forward.4} parent=0 // pred_check_branch
    %16 = sbr.rel (0) target = $region13
  $region12: #{two_heads_miou_forward.4} parent=0 // pred_region
    _
  $region13: #{two_heads_miou_forward.4} parent=0 // pred_fallthru
    _
  // Predicated region
  $region14: #{two_heads_miou_forward.4} parent=0 // pred_check
    _
  $region15: #{two_heads_miou_forward.4} parent=0 // pred_check_branch
    %18 = sbr.rel (0) target = $region17
  $region16: #{two_heads_miou_forward.4} parent=0 // pred_region
    _
  $region17: #{two_heads_miou_forward.4} parent=0 // pred_fallthru
    _
  // Predicated region
  $region18: #{two_heads_miou_forward.4} parent=0 // pred_check
    _
  $region19: #{two_heads_miou_forward.4} parent=0 // pred_check_branch
    %20 = sbr.rel (0) target = $region21
  $region20: #{two_heads_miou_forward.4} parent=0 // pred_region
    _
  $region21: #{two_heads_miou_forward.4} parent=0 // pred_fallthru
    _
  // Predicated region
  $region22: #{two_heads_miou_forward.4} parent=0 // pred_check
    _
  $region23: #{two_heads_miou_forward.4} parent=0 // pred_check_branch
    %22 = sbr.rel (0) target = $region25
  $region24: #{two_heads_miou_forward.4} parent=0 // pred_region
    _
  $region25: #{two_heads_miou_forward.4} parent=0 // pred_fallthru
    _
  %v23 = vld [vmem:[%s0] sm:$0xff]
  %v24 = vld [vmem:[%s1] sm:$0xff]
  %v25 = vld [vmem:[%s1 + $0x8] sm:$0xf]
  %v26 = vld [vmem:[%s2] sm:$0x1]
  %28 = vset.pattern.permute.xlu0 0
  %29 = vperm.xlu0 %28, %v23
  %v30 = vpop.permute.xlu0 %29
  %v32 = vperm.slane %v24, 0
  %v33 = vmul.f32 %v30, %v32
  %v35 = vperm.slane %v26, 0
  %v37 = vadd.f32 %v35, %v33
  %38 = vset.pattern.permute.xlu0 1
  %39 = vperm.xlu0 %38, %v23
  %v40 = vpop.permute.xlu0 %39
  %v42 = vperm.slane %v24, 1
  %v43 = vmul.f32 %v40, %v42
  %v44 = vadd.f32 %v37, %v43
  %45 = vset.pattern.permute.xlu0 2
  %46 = vperm.xlu0 %45, %v23
  %v47 = vpop.permute.xlu0 %46
  %v49 = vperm.slane %v24, 2
  %v50 = vmul.f32 %v47, %v49
  %v51 = vadd.f32 %v44, %v50
  %52 = vset.pattern.permute.xlu0 3
  %53 = vperm.xlu0 %52, %v23
  %v54 = vpop.permute.xlu0 %53
  %v56 = vperm.slane %v24, 3
  %v57 = vmul.f32 %v54, %v56
  %v58 = vadd.f32 %v51, %v57
  %59 = vset.pattern.permute.xlu0 4
  %60 = vperm.xlu0 %59, %v23
  %v61 = vpop.permute.xlu0 %60
  %v63 = vperm.slane %v24, 4
  %v64 = vmul.f32 %v61, %v63
  %v65 = vadd.f32 %v58, %v64
  %66 = vset.pattern.permute.xlu0 5
  %67 = vperm.xlu0 %66, %v23
  %v68 = vpop.permute.xlu0 %67
  %v70 = vperm.slane %v24, 5
  %v71 = vmul.f32 %v68, %v70
  %v72 = vadd.f32 %v65, %v71
  %73 = vset.pattern.permute.xlu0 6
  %74 = vperm.xlu0 %73, %v23
  %v75 = vpop.permute.xlu0 %74
  %v77 = vperm.slane %v24, 6
  %v78 = vmul.f32 %v75, %v77
  %v79 = vadd.f32 %v72, %v78
  %80 = vset.pattern.permute.xlu0 7
  %81 = vperm.xlu0 %80, %v23
  %v82 = vpop.permute.xlu0 %81
  %v84 = vperm.slane %v24, 7
  %v85 = vmul.f32 %v82, %v84
  %v86 = vadd.f32 %v79, %v85
  %87 = vset.pattern.permute.xlu0 8
  %88 = vperm.xlu0 %87, %v23
  %v89 = vpop.permute.xlu0 %88
  %v91 = vperm.slane %v25, 0
  %v92 = vmul.f32 %v89, %v91
  %v93 = vadd.f32 %v86, %v92
  %94 = vset.pattern.permute.xlu0 9
  %95 = vperm.xlu0 %94, %v23
  %v96 = vpop.permute.xlu0 %95
  %v98 = vperm.slane %v25, 1
  %v99 = vmul.f32 %v96, %v98
  %v100 = vadd.f32 %v93, %v99
  %101 = vset.pattern.permute.xlu0 10
  %102 = vperm.xlu0 %101, %v23
  %v103 = vpop.permute.xlu0 %102
  %v105 = vperm.slane %v25, 2
  %v106 = vmul.f32 %v103, %v105
  %v107 = vadd.f32 %v100, %v106
  %108 = vset.pattern.permute.xlu0 11
  %109 = vperm.xlu0 %108, %v23
  %v110 = vpop.permute.xlu0 %109
  %v112 = vperm.slane %v25, 3
  %v113 = vmul.f32 %v110, %v112
  %v114 = vadd.f32 %v107, %v113
  %v115 = vmax.f32 %v114, 0.0
  %v116 = vld [vmem:[%s3] sm:$0xff]
  %v117 = vld [vmem:[%s3 + $0x8] sm:$0xff]
  %v118 = vld [vmem:[%s3 + $0x10] sm:$0xff]
  %v119 = vld [vmem:[%s3 + $0x18] sm:$0xff]
  %v120 = vld [vmem:[%s3 + $0x20] sm:$0xff]
  %v121 = vld [vmem:[%s3 + $0x28] sm:$0xff]
  %v122 = vld [vmem:[%s3 + $0x30] sm:$0xff]
  %v123 = vld [vmem:[%s3 + $0x38] sm:$0xff]
  %v124 = vld [vmem:[%s3 + $0x40] sm:$0xff]
  %v125 = vld [vmem:[%s3 + $0x48] sm:$0xff]
  %v126 = vld [vmem:[%s3 + $0x50] sm:$0xff]
  %v127 = vld [vmem:[%s3 + $0x58] sm:$0xff]
  %v128 = vld [vmem:[%s3 + $0x60] sm:$0xff]
  %v129 = vld [vmem:[%s3 + $0x68] sm:$0xff]
  %v130 = vld [vmem:[%s3 + $0x70] sm:$0xff]
  %v131 = vld [vmem:[%s3 + $0x78] sm:$0xff]
  %v132 = vld [vmem:[%s3 + $0x80] sm:$0xff]
  %v133 = vld [vmem:[%s3 + $0x88] sm:$0xff]
  %v134 = vld [vmem:[%s3 + $0x90] sm:$0xff]
  %v135 = vld [vmem:[%s3 + $0x98] sm:$0xff]
  %v136 = vld [vmem:[%s3 + $0xa0] sm:$0xff]
  %v137 = vld [vmem:[%s3 + $0xa8] sm:$0xff]
  %v138 = vld [vmem:[%s3 + $0xb0] sm:$0xff]
  %v139 = vld [vmem:[%s3 + $0xb8] sm:$0xff]
  %v140 = vld [vmem:[%s3 + $0xc0] sm:$0xff]
  %v141 = vld [vmem:[%s3 + $0xc8] sm:$0xff]
  %v142 = vld [vmem:[%s3 + $0xd0] sm:$0xff]
  %v143 = vld [vmem:[%s3 + $0xd8] sm:$0xff]
  %v144 = vld [vmem:[%s3 + $0xe0] sm:$0xff]
  %v145 = vld [vmem:[%s3 + $0xe8] sm:$0xff]
  %v146 = vld [vmem:[%s3 + $0xf0] sm:$0xff]
  %v147 = vld [vmem:[%s3 + $0xf8] sm:$0xff]
  %v148 = vld [vmem:[%s4] sm:$0x3]
  %v150 = vperm.slane %v148, 0
  %v151 = vperm.slane %v148, 1
  %154 = vmatpush.msra.mxu0 %v146
  %155 = vmatpush.msra.mxu0 %v144
  %156 = vmatpush.msra.mxu0 %v142
  %157 = vmatpush.msra.mxu0 %v140
  %158 = vmatpush.msra.mxu0 %v138
  %159 = vmatpush.msra.mxu0 %v136
  %160 = vmatpush.msra.mxu0 %v134
  %161 = vmatpush.msra.mxu0 %v132
  %162 = vmatpush.msra.mxu0 %v130
  %163 = vmatpush.msra.mxu0 %v128
  %164 = vmatpush.msra.mxu0 %v126
  %165 = vmatpush.msra.mxu0 %v124
  %166 = vmatpush.msra.mxu0 %v122
  %167 = vmatpush.msra.mxu0 %v120
  %168 = vmatpush.msra.mxu0 %v118
  %169 = vmatpush.msra.mxu0 %v116
  %170 = vmatmul.f32.gmra.mxu0 %v115
  %v171 = vpop.f32.mrf.mxu0
  %v172 = vadd.f32 %v150, %v171
  %173 = vdwg.mxu0
  %174 = vmatpush.msra.mxu0 %v147
  %175 = vmatpush.msra.mxu0 %v145
  %176 = vmatpush.msra.mxu0 %v143
  %177 = vmatpush.msra.mxu0 %v141
  %178 = vmatpush.msra.mxu0 %v139
  %179 = vmatpush.msra.mxu0 %v137
  %180 = vmatpush.msra.mxu0 %v135
  %181 = vmatpush.msra.mxu0 %v133
  %182 = vmatpush.msra.mxu0 %v131
  %183 = vmatpush.msra.mxu0 %v129
  %184 = vmatpush.msra.mxu0 %v127
  %185 = vmatpush.msra.mxu0 %v125
  %186 = vmatpush.msra.mxu0 %v123
  %187 = vmatpush.msra.mxu0 %v121
  %188 = vmatpush.msra.mxu0 %v119
  %189 = vmatpush.msra.mxu0 %v117
  %190 = vmatmul.f32.gmra.mxu0 %v115
  %v191 = vpop.f32.mrf.mxu0
  %v192 = vadd.f32 %v151, %v191
  %193 = vdwg.mxu0
  %v194 = vld [vmem:[%s5] sm:$0xff]
  %v195 = vunpack.c.l.bf16 %v194
  %v196 = vunpack.c.h.bf16 %v194
  %v197 = vadd.f32 %v172, %v195
  %v198 = vadd.f32 %v192, %v196
  %v199 = vpack.c.bf16 %v198, %v197
  %200 = vst [vmem:[%s6] sm:$0xff] %v199
  // Predicated region
  $region26: #{two_heads_miou_forward.4} parent=0 // pred_check
    _
  $region27: #{two_heads_miou_forward.4} parent=0 // pred_check_branch
    %202 = sbr.rel (0) target = $region29
  $region28: #{two_heads_miou_forward.4} parent=0 // pred_region
    _
  $region29: #{two_heads_miou_forward.4} parent=0 // pred_fallthru
    _
  // Predicated region
  $region30: #{two_heads_miou_forward.4} parent=0 // pred_check
    _
  $region31: #{two_heads_miou_forward.4} parent=0 // pred_check_branch
    %204 = sbr.rel (0) target = $region33
  $region32: #{two_heads_miou_forward.4} parent=0 // pred_region
    _
  $region33: #{two_heads_miou_forward.4} parent=0 // pred_fallthru
    _

// kernel: two_heads_miou_forward.5
$region0: #{two_heads_miou_forward.5}
  #allocation0 [shape = 'u32[]', space=smem, size = 0x4, offset = 0x4, fixed_abs, tag = 'smem constant byte address 0x4 - core index']
  #allocation1 [shape = 'u32[72,128]{1,0:T(1,128)}', space=vmem, size = 0x9000, scoped, tag = 'internal scratch']
  %s0 = inlined_call_operand.vmem [shape: f32[8,24], index: 0, kind: input, shape index: {}]
  %s1 = inlined_call_operand.vmem [shape: f32[24,128], index: 1, kind: input, shape index: {}]
  %s2 = inlined_call_operand.vmem [shape: f32[1,128], index: 2, kind: input, shape index: {}]
  %s3 = inlined_call_operand.vmem [shape: f32[128,512], index: 3, kind: input, shape index: {}]
  %s4 = inlined_call_operand.vmem [shape: f32[1,512], index: 4, kind: input, shape index: {}]
  %s5 = inlined_call_operand.vmem [shape: bf16[8,512], index: 5, kind: input, shape index: {}]
  %s6 = inlined_call_operand.vmem [shape: f32[8,512], index: 6, kind: output, shape index: {}]
  %s7 = sld [smem:[#allocation0]]
  $region34: #{two_heads_miou_forward.5} parent=0
    _
  %s9 = ssub.s32 1, %s7
  %s10 = scalar_select 0, %s9, %s7
  // Predicated region
  $region2: #{two_heads_miou_forward.5} parent=0 // pred_check
    _
  $region3: #{two_heads_miou_forward.5} parent=0 // pred_check_branch
    %12 = sbr.rel (0) target = $region5
  $region4: #{two_heads_miou_forward.5} parent=0 // pred_region
    _
  $region5: #{two_heads_miou_forward.5} parent=0 // pred_fallthru
    _
  // Predicated region
  $region6: #{two_heads_miou_forward.5} parent=0 // pred_check
    _
  $region7: #{two_heads_miou_forward.5} parent=0 // pred_check_branch
    %14 = sbr.rel (0) target = $region9
  $region8: #{two_heads_miou_forward.5} parent=0 // pred_region
    _
  $region9: #{two_heads_miou_forward.5} parent=0 // pred_fallthru
    _
  // Predicated region
  $region10: #{two_heads_miou_forward.5} parent=0 // pred_check
    _
  $region11: #{two_heads_miou_forward.5} parent=0 // pred_check_branch
    %16 = sbr.rel (0) target = $region13
  $region12: #{two_heads_miou_forward.5} parent=0 // pred_region
    _
  $region13: #{two_heads_miou_forward.5} parent=0 // pred_fallthru
    _
  // Predicated region
  $region14: #{two_heads_miou_forward.5} parent=0 // pred_check
    _
  $region15: #{two_heads_miou_forward.5} parent=0 // pred_check_branch
    %18 = sbr.rel (0) target = $region17
  $region16: #{two_heads_miou_forward.5} parent=0 // pred_region
    _
  $region17: #{two_heads_miou_forward.5} parent=0 // pred_fallthru
    _
  // Predicated region
  $region18: #{two_heads_miou_forward.5} parent=0 // pred_check
    _
  $region19: #{two_heads_miou_forward.5} parent=0 // pred_check_branch
    %20 = sbr.rel (0) target = $region21
  $region20: #{two_heads_miou_forward.5} parent=0 // pred_region
    _
  $region21: #{two_heads_miou_forward.5} parent=0 // pred_fallthru
    _
  // Predicated region
  $region22: #{two_heads_miou_forward.5} parent=0 // pred_check
    _
  $region23: #{two_heads_miou_forward.5} parent=0 // pred_check_branch
    %22 = sbr.rel (0) target = $region25
  $region24: #{two_heads_miou_forward.5} parent=0 // pred_region
    _
  $region25: #{two_heads_miou_forward.5} parent=0 // pred_fallthru
    _
  %v23 = vld [vmem:[%s0] sm:$0xff]
  %v24 = vld [vmem:[%s1] sm:$0xff]
  %v25 = vld [vmem:[%s1 + $0x8] sm:$0xff]
  %v26 = vld [vmem:[%s1 + $0x10] sm:$0xff]
  %v27 = vld [vmem:[%s2] sm:$0x1]
  %29 = vset.pattern.permute.xlu0 0
  %30 = vperm.xlu0 %29, %v23
  %v31 = vpop.permute.xlu0 %30
  %v33 = vperm.slane %v24, 0
  %v34 = vmul.f32 %v31, %v33
  %v36 = vperm.slane %v27, 0
  %v38 = vadd.f32 %v36, %v34
  %39 = vset.pattern.permute.xlu0 1
  %40 = vperm.xlu0 %39, %v23
  %v41 = vpop.permute.xlu0 %40
  %v43 = vperm.slane %v24, 1
  %v44 = vmul.f32 %v41, %v43
  %v45 = vadd.f32 %v38, %v44
  %46 = vset.pattern.permute.xlu0 2
  %47 = vperm.xlu0 %46, %v23
  %v48 = vpop.permute.xlu0 %47
  %v50 = vperm.slane %v24, 2
  %v51 = vmul.f32 %v48, %v50
  %v52 = vadd.f32 %v45, %v51
  %53 = vset.pattern.permute.xlu0 3
  %54 = vperm.xlu0 %53, %v23
  %v55 = vpop.permute.xlu0 %54
  %v57 = vperm.slane %v24, 3
  %v58 = vmul.f32 %v55, %v57
  %v59 = vadd.f32 %v52, %v58
  %60 = vset.pattern.permute.xlu0 4
  %61 = vperm.xlu0 %60, %v23
  %v62 = vpop.permute.xlu0 %61
  %v64 = vperm.slane %v24, 4
  %v65 = vmul.f32 %v62, %v64
  %v66 = vadd.f32 %v59, %v65
  %67 = vset.pattern.permute.xlu0 5
  %68 = vperm.xlu0 %67, %v23
  %v69 = vpop.permute.xlu0 %68
  %v71 = vperm.slane %v24, 5
  %v72 = vmul.f32 %v69, %v71
  %v73 = vadd.f32 %v66, %v72
  %74 = vset.pattern.permute.xlu0 6
  %75 = vperm.xlu0 %74, %v23
  %v76 = vpop.permute.xlu0 %75
  %v78 = vperm.slane %v24, 6
  %v79 = vmul.f32 %v76, %v78
  %v80 = vadd.f32 %v73, %v79
  %81 = vset.pattern.permute.xlu0 7
  %82 = vperm.xlu0 %81, %v23
  %v83 = vpop.permute.xlu0 %82
  %v85 = vperm.slane %v24, 7
  %v86 = vmul.f32 %v83, %v85
  %v87 = vadd.f32 %v80, %v86
  %88 = vset.pattern.permute.xlu0 8
  %89 = vperm.xlu0 %88, %v23
  %v90 = vpop.permute.xlu0 %89
  %v92 = vperm.slane %v25, 0
  %v93 = vmul.f32 %v90, %v92
  %v94 = vadd.f32 %v87, %v93
  %95 = vset.pattern.permute.xlu0 9
  %96 = vperm.xlu0 %95, %v23
  %v97 = vpop.permute.xlu0 %96
  %v99 = vperm.slane %v25, 1
  %v100 = vmul.f32 %v97, %v99
  %v101 = vadd.f32 %v94, %v100
  %102 = vset.pattern.permute.xlu0 10
  %103 = vperm.xlu0 %102, %v23
  %v104 = vpop.permute.xlu0 %103
  %v106 = vperm.slane %v25, 2
  %v107 = vmul.f32 %v104, %v106
  %v108 = vadd.f32 %v101, %v107
  %109 = vset.pattern.permute.xlu0 11
  %110 = vperm.xlu0 %109, %v23
  %v111 = vpop.permute.xlu0 %110
  %v113 = vperm.slane %v25, 3
  %v114 = vmul.f32 %v111, %v113
  %v115 = vadd.f32 %v108, %v114
  %116 = vset.pattern.permute.xlu0 12
  %117 = vperm.xlu0 %116, %v23
  %v118 = vpop.permute.xlu0 %117
  %v120 = vperm.slane %v25, 4
  %v121 = vmul.f32 %v118, %v120
  %v122 = vadd.f32 %v115, %v121
  %123 = vset.pattern.permute.xlu0 13
  %124 = vperm.xlu0 %123, %v23
  %v125 = vpop.permute.xlu0 %124
  %v127 = vperm.slane %v25, 5
  %v128 = vmul.f32 %v125, %v127
  %v129 = vadd.f32 %v122, %v128
  %130 = vset.pattern.permute.xlu0 14
  %131 = vperm.xlu0 %130, %v23
  %v132 = vpop.permute.xlu0 %131
  %v134 = vperm.slane %v25, 6
  %v135 = vmul.f32 %v132, %v134
  %v136 = vadd.f32 %v129, %v135
  %137 = vset.pattern.permute.xlu0 15
  %138 = vperm.xlu0 %137, %v23
  %v139 = vpop.permute.xlu0 %138
  %v141 = vperm.slane %v25, 7
  %v142 = vmul.f32 %v139, %v141
  %v143 = vadd.f32 %v136, %v142
  %144 = vset.pattern.permute.xlu0 16
  %145 = vperm.xlu0 %144, %v23
  %v146 = vpop.permute.xlu0 %145
  %v148 = vperm.slane %v26, 0
  %v149 = vmul.f32 %v146, %v148
  %v150 = vadd.f32 %v143, %v149
  %151 = vset.pattern.permute.xlu0 17
  %152 = vperm.xlu0 %151, %v23
  %v153 = vpop.permute.xlu0 %152
  %v155 = vperm.slane %v26, 1
  %v156 = vmul.f32 %v153, %v155
  %v157 = vadd.f32 %v150, %v156
  %158 = vset.pattern.permute.xlu0 18
  %159 = vperm.xlu0 %158, %v23
  %v160 = vpop.permute.xlu0 %159
  %v162 = vperm.slane %v26, 2
  %v163 = vmul.f32 %v160, %v162
  %v164 = vadd.f32 %v157, %v163
  %165 = vset.pattern.permute.xlu0 19
  %166 = vperm.xlu0 %165, %v23
  %v167 = vpop.permute.xlu0 %166
  %v169 = vperm.slane %v26, 3
  %v170 = vmul.f32 %v167, %v169
  %v171 = vadd.f32 %v164, %v170
  %172 = vset.pattern.permute.xlu0 20
  %173 = vperm.xlu0 %172, %v23
  %v174 = vpop.permute.xlu0 %173
  %v176 = vperm.slane %v26, 4
  %v177 = vmul.f32 %v174, %v176
  %v178 = vadd.f32 %v171, %v177
  %179 = vset.pattern.permute.xlu0 21
  %180 = vperm.xlu0 %179, %v23
  %v181 = vpop.permute.xlu0 %180
  %v183 = vperm.slane %v26, 5
  %v184 = vmul.f32 %v181, %v183
  %v185 = vadd.f32 %v178, %v184
  %186 = vset.pattern.permute.xlu0 22
  %187 = vperm.xlu0 %186, %v23
  %v188 = vpop.permute.xlu0 %187
  %v190 = vperm.slane %v26, 6
  %v191 = vmul.f32 %v188, %v190
  %v192 = vadd.f32 %v185, %v191
  %193 = vset.pattern.permute.xlu0 23
  %194 = vperm.xlu0 %193, %v23
  %v195 = vpop.permute.xlu0 %194
  %v197 = vperm.slane %v26, 7
  %v198 = vmul.f32 %v195, %v197
  %v199 = vadd.f32 %v192, %v198
  %v200 = vmax.f32 %v199, 0.0
  %v201 = vld [vmem:[%s3] sm:$0xff]
  %v202 = vld [vmem:[%s3 + $0x8] sm:$0xff]
  %v203 = vld [vmem:[%s3 + $0x10] sm:$0xff]
  %v204 = vld [vmem:[%s3 + $0x18] sm:$0xff]
  %v205 = vld [vmem:[%s3 + $0x20] sm:$0xff]
  %v206 = vld [vmem:[%s3 + $0x28] sm:$0xff]
  %v207 = vld [vmem:[%s3 + $0x30] sm:$0xff]
  %v208 = vld [vmem:[%s3 + $0x38] sm:$0xff]
  %v209 = vld [vmem:[%s3 + $0x40] sm:$0xff]
  %v210 = vld [vmem:[%s3 + $0x48] sm:$0xff]
  %v211 = vld [vmem:[%s3 + $0x50] sm:$0xff]
  %v212 = vld [vmem:[%s3 + $0x58] sm:$0xff]
  %v213 = vld [vmem:[%s3 + $0x60] sm:$0xff]
  %v214 = vld [vmem:[%s3 + $0x68] sm:$0xff]
  %v215 = vld [vmem:[%s3 + $0x70] sm:$0xff]
  %v216 = vld [vmem:[%s3 + $0x78] sm:$0xff]
  %v217 = vld [vmem:[%s3 + $0x80] sm:$0xff]
  %v218 = vld [vmem:[%s3 + $0x88] sm:$0xff]
  %v219 = vld [vmem:[%s3 + $0x90] sm:$0xff]
  %v220 = vld [vmem:[%s3 + $0x98] sm:$0xff]
  %v221 = vld [vmem:[%s3 + $0xa0] sm:$0xff]
  %v222 = vld [vmem:[%s3 + $0xa8] sm:$0xff]
  %v223 = vld [vmem:[%s3 + $0xb0] sm:$0xff]
  %v224 = vld [vmem:[%s3 + $0xb8] sm:$0xff]
  %v225 = vld [vmem:[%s3 + $0xc0] sm:$0xff]
  %v226 = vld [vmem:[%s3 + $0xc8] sm:$0xff]
  %v227 = vld [vmem:[%s3 + $0xd0] sm:$0xff]
  %v228 = vld [vmem:[%s3 + $0xd8] sm:$0xff]
  %v229 = vld [vmem:[%s3 + $0xe0] sm:$0xff]
  %v230 = vld [vmem:[%s3 + $0xe8] sm:$0xff]
  %v231 = vld [vmem:[%s3 + $0xf0] sm:$0xff]
  %v232 = vld [vmem:[%s3 + $0xf8] sm:$0xff]
  %v233 = vld [vmem:[%s3 + $0x100] sm:$0xff]
  %v234 = vld [vmem:[%s3 + $0x108] sm:$0xff]
  %v235 = vld [vmem:[%s3 + $0x110] sm:$0xff]
  %v236 = vld [vmem:[%s3 + $0x118] sm:$0xff]
  %v237 = vld [vmem:[%s3 + $0x120] sm:$0xff]
  %v238 = vld [vmem:[%s3 + $0x128] sm:$0xff]
  %v239 = vld [vmem:[%s3 + $0x130] sm:$0xff]
  %v240 = vld [vmem:[%s3 + $0x138] sm:$0xff]
  %v241 = vld [vmem:[%s3 + $0x140] sm:$0xff]
  %v242 = vld [vmem:[%s3 + $0x148] sm:$0xff]
  %v243 = vld [vmem:[%s3 + $0x150] sm:$0xff]
  %v244 = vld [vmem:[%s3 + $0x158] sm:$0xff]
  %v245 = vld [vmem:[%s3 + $0x160] sm:$0xff]
  %v246 = vld [vmem:[%s3 + $0x168] sm:$0xff]
  %v247 = vld [vmem:[%s3 + $0x170] sm:$0xff]
  %v248 = vld [vmem:[%s3 + $0x178] sm:$0xff]
  %v249 = vld [vmem:[%s3 + $0x180] sm:$0xff]
  %v250 = vld [vmem:[%s3 + $0x188] sm:$0xff]
  %v251 = vld [vmem:[%s3 + $0x190] sm:$0xff]
  %v252 = vld [vmem:[%s3 + $0x198] sm:$0xff]
  %v253 = vld [vmem:[%s3 + $0x1a0] sm:$0xff]
  %v254 = vld [vmem:[%s3 + $0x1a8] sm:$0xff]
  %v255 = vld [vmem:[%s3 + $0x1b0] sm:$0xff]
  %v256 = vld [vmem:[%s3 + $0x1b8] sm:$0xff]
  %v257 = vld [vmem:[%s3 + $0x1c0] sm:$0xff]
  %v258 = vld [vmem:[%s3 + $0x1c8] sm:$0xff]
  %v259 = vld [vmem:[%s3 + $0x1d0] sm:$0xff]
  %v260 = vld [vmem:[%s3 + $0x1d8] sm:$0xff]
  %v261 = vld [vmem:[%s3 + $0x1e0] sm:$0xff]
  %v262 = vld [vmem:[%s3 + $0x1e8] sm:$0xff]
  %v263 = vld [vmem:[%s3 + $0x1f0] sm:$0xff]
  %v264 = vld [vmem:[%s3 + $0x1f8] sm:$0xff]
  %v265 = vld [vmem:[%s4] sm:$0xf]
  %v267 = vperm.slane %v265, 0
  %v268 = vperm.slane %v265, 1
  %v269 = vperm.slane %v265, 2
  %v270 = vperm.slane %v265, 3
  %275 = vmatpush.msra.mxu0 %v261
  %276 = vmatpush.msra.mxu0 %v257
  %277 = vmatpush.msra.mxu0 %v253
  %278 = vmatpush.msra.mxu0 %v249
  %279 = vmatpush.msra.mxu0 %v245
  %280 = vmatpush.msra.mxu0 %v241
  %281 = vmatpush.msra.mxu0 %v237
  %282 = vmatpush.msra.mxu0 %v233
  %283 = vmatpush.msra.mxu0 %v229
  %284 = vmatpush.msra.mxu0 %v225
  %285 = vmatpush.msra.mxu0 %v221
  %286 = vmatpush.msra.mxu0 %v217
  %287 = vmatpush.msra.mxu0 %v213
  %288 = vmatpush.msra.mxu0 %v209
  %289 = vmatpush.msra.mxu0 %v205
  %290 = vmatpush.msra.mxu0 %v201
  %291 = vmatmul.f32.gmra.mxu0 %v200
  %v292 = vpop.f32.mrf.mxu0
  %v293 = vadd.f32 %v267, %v292
  %294 = vdwg.mxu0
  %295 = vmatpush.msra.mxu0 %v262
  %296 = vmatpush.msra.mxu0 %v258
  %297 = vmatpush.msra.mxu0 %v254
  %298 = vmatpush.msra.mxu0 %v250
  %299 = vmatpush.msra.mxu0 %v246
  %300 = vmatpush.msra.mxu0 %v242
  %301 = vmatpush.msra.mxu0 %v238
  %302 = vmatpush.msra.mxu0 %v234
  %303 = vmatpush.msra.mxu0 %v230
  %304 = vmatpush.msra.mxu0 %v226
  %305 = vmatpush.msra.mxu0 %v222
  %306 = vmatpush.msra.mxu0 %v218
  %307 = vmatpush.msra.mxu0 %v214
  %308 = vmatpush.msra.mxu0 %v210
  %309 = vmatpush.msra.mxu0 %v206
  %310 = vmatpush.msra.mxu0 %v202
  %311 = vmatmul.f32.gmra.mxu0 %v200
  %v312 = vpop.f32.mrf.mxu0
  %v313 = vadd.f32 %v268, %v312
  %314 = vdwg.mxu0
  %315 = vmatpush.msra.mxu0 %v263
  %316 = vmatpush.msra.mxu0 %v259
  %317 = vmatpush.msra.mxu0 %v255
  %318 = vmatpush.msra.mxu0 %v251
  %319 = vmatpush.msra.mxu0 %v247
  %320 = vmatpush.msra.mxu0 %v243
  %321 = vmatpush.msra.mxu0 %v239
  %322 = vmatpush.msra.mxu0 %v235
  %323 = vmatpush.msra.mxu0 %v231
  %324 = vmatpush.msra.mxu0 %v227
  %325 = vmatpush.msra.mxu0 %v223
  %326 = vmatpush.msra.mxu0 %v219
  %327 = vmatpush.msra.mxu0 %v215
  %328 = vmatpush.msra.mxu0 %v211
  %329 = vmatpush.msra.mxu0 %v207
  %330 = vmatpush.msra.mxu0 %v203
  %331 = vmatmul.f32.gmra.mxu0 %v200
  %v332 = vpop.f32.mrf.mxu0
  %v333 = vadd.f32 %v269, %v332
  %334 = vdwg.mxu0
  %335 = vmatpush.msra.mxu0 %v264
  %336 = vmatpush.msra.mxu0 %v260
  %337 = vmatpush.msra.mxu0 %v256
  %338 = vmatpush.msra.mxu0 %v252
  %339 = vmatpush.msra.mxu0 %v248
  %340 = vmatpush.msra.mxu0 %v244
  %341 = vmatpush.msra.mxu0 %v240
  %342 = vmatpush.msra.mxu0 %v236
  %343 = vmatpush.msra.mxu0 %v232
  %344 = vmatpush.msra.mxu0 %v228
  %345 = vmatpush.msra.mxu0 %v224
  %346 = vmatpush.msra.mxu0 %v220
  %347 = vmatpush.msra.mxu0 %v216
  %348 = vmatpush.msra.mxu0 %v212
  %349 = vmatpush.msra.mxu0 %v208
  %350 = vmatpush.msra.mxu0 %v204
  %351 = vmatmul.f32.gmra.mxu0 %v200
  %v352 = vpop.f32.mrf.mxu0
  %v353 = vadd.f32 %v270, %v352
  %354 = vdwg.mxu0
  %v355 = vld [vmem:[%s5] sm:$0xff]
  %v356 = vld [vmem:[%s5 + $0x8] sm:$0xff]
  %v357 = vunpack.c.l.bf16 %v355
  %v358 = vunpack.c.h.bf16 %v355
  %v359 = vunpack.c.l.bf16 %v356
  %v360 = vunpack.c.h.bf16 %v356
  %v361 = vadd.f32 %v293, %v357
  %v362 = vadd.f32 %v313, %v358
  %v363 = vadd.f32 %v333, %v359
  %v364 = vadd.f32 %v353, %v360
  %365 = vst [vmem:[%s6] sm:$0xff] %v361
  %366 = vst [vmem:[%s6 + $0x8] sm:$0xff] %v362
  %367 = vst [vmem:[%s6 + $0x10] sm:$0xff] %v363
  %368 = vst [vmem:[%s6 + $0x18] sm:$0xff] %v364
  // Predicated region
  $region26: #{two_heads_miou_forward.5} parent=0 // pred_check
    _
  $region27: #{two_heads_miou_forward.5} parent=0 // pred_check_branch
    %370 = sbr.rel (0) target = $region29
  $region28: #{two_heads_miou_forward.5} parent=0 // pred_region
    _
  $region29: #{two_heads_miou_forward.5} parent=0 // pred_fallthru
    _
  // Predicated region
  $region30: #{two_heads_miou_forward.5} parent=0 // pred_check
    _
  $region31: #{two_heads_miou_forward.5} parent=0 // pred_check_branch
    %372 = sbr.rel (0) target = $region33
  $region32: #{two_heads_miou_forward.5} parent=0 // pred_region
    _
  $region33: #{two_heads_miou_forward.5} parent=0 // pred_fallthru
    _

</llo_original>
